<compile_context>
chip_gen: v7x
topology: tpu7x:2x2x1
jax: 0.10.0
libtpu: 0.0.40
codegen_flags: <defaults>
</compile_context>

<pallas_src>
import jax
import jax.numpy as jnp
from jax.experimental import pallas as pl
from jax.experimental.pallas import tpu as pltpu

C = 154  # channel count fixed by the module (Conv2d(154, 154, kernel_size=1))


def qcm_kernel(x_ref, w1_ref, b1_ref, w2_ref, b2_ref, w3_ref, b3_ref, o_ref):
    # x_ref/o_ref: (C, TP) tile (channels on sublanes, pixels on lanes)
    # w*_ref:      (C_out, C_in) resident weights (bf16)
    # b*_ref:      (C, 1) bias, broadcast along lanes
    x = x_ref[...].astype(jnp.float32)
    for w_ref, b_ref in ((w1_ref, b1_ref), (w2_ref, b2_ref), (w3_ref, b3_ref)):
        y = jnp.dot(w_ref[...], x.astype(w_ref.dtype),
                    preferred_element_type=jnp.float32) + b_ref[...]
        x = jnp.maximum(y, 0.0) + x          # relu(conv(x)) + residual
    o_ref[...] = x.astype(o_ref.dtype)


def quant_comp_forward(x_nchw, params, *, tp=1024, matmul_dtype=jnp.bfloat16):
    """params = ((w1, b1), (w2, b2), (w3, b3)); w_i is (C_out, C_in), b_i is (C, 1).

    tp: pixel tile (lanes).  Sweep 512-2048 on real shapes; weights (~0.15 MiB
    in bf16) stay resident, so VMEM use is ~4 * (160*tp*4) bytes of pipelined
    tiles -- well inside default scoped VMEM on v5e/v6e/v7x for tp<=2048.
    """
    N, Cin, H, W = x_nchw.shape
    assert Cin == C
    HW = H * W
    x_mat = x_nchw.reshape(N, C, HW)          # free view, no transpose

    # Lane tile: multiple of 128, no larger than the (rounded-up) image size.
    tp = max(128, min(tp, ((HW + 127) // 128) * 128))
    n_p = pl.cdiv(HW, tp)                     # boundary blocks are masked

    kernel_args = []
    for w, b in params:
        kernel_args.append(w.astype(matmul_dtype))   # MXU-native operands
        kernel_args.append(b.astype(jnp.float32))

    x_spec = pl.BlockSpec((None, C, tp), lambda n, p: (n, 0, p))
    w_spec = pl.BlockSpec((C, C), lambda n, p: (0, 0))   # resident
    b_spec = pl.BlockSpec((C, 1), lambda n, p: (0, 0))   # resident

    out = pl.pallas_call(
        qcm_kernel,
        out_shape=jax.ShapeDtypeStruct((N, C, HW), x_nchw.dtype),
        grid_spec=pltpu.PrefetchScalarGridSpec(
            num_scalar_prefetch=0,
            grid=(N, n_p),
            in_specs=[
                x_spec,
                w_spec, b_spec,   # conv1
                w_spec, b_spec,   # conv2
                w_spec, b_spec,   # conv3
            ],
            out_specs=x_spec,
        ),
        compiler_params=pltpu.CompilerParams(
            dimension_semantics=("parallel", "parallel")),
    )(x_mat, *kernel_args)

    return out.reshape(N, C, H, W)


def init_params(key):
    """Deterministic init mimicking PyTorch Conv2d defaults (uniform +-1/sqrt(fan_in)).

    Weights stored as (C_out, C_in) == PyTorch conv weight[:, :, 0, 0]."""
    bound = 1.0 / (C ** 0.5)
    params = []
    for _ in range(3):
        key, kw, kb = jax.random.split(key, 3)
        w = jax.random.uniform(kw, (C, C), jnp.float32, -bound, bound)
        b = jax.random.uniform(kb, (C, 1), jnp.float32, -bound, bound)
        params.append((w, b))
    return tuple(params)


def reference_forward(x_nchw, params, *, matmul_dtype=jnp.float32):
    """Pure-JAX reference of the PyTorch forward (1x1 conv == channel matmul).

    matmul_dtype rounds the matmul operands (to mirror the kernel's bf16
    MXU path) while accumulating in f32."""
    N, Cc, H, W = x_nchw.shape
    x = x_nchw.reshape(N, Cc, H * W).astype(jnp.float32)
    for w, b in params:
        wq = w.astype(matmul_dtype).astype(jnp.float32)
        xq = x.astype(matmul_dtype).astype(jnp.float32)
        y = jnp.einsum('oc,ncp->nop', wq, xq, precision='highest') + b[None]
        x = jnp.maximum(y, 0.0) + x
    return x.reshape(N, Cc, H, W)


if __name__ == "__main__":
    key = jax.random.PRNGKey(0)
    kx, kp = jax.random.split(key)

    # Small example consistent with the module: batch=2, C=154, spatial=16x16.
    x = jax.random.normal(kx, (2, C, 16, 16), dtype=jnp.float32)
    params = init_params(kp)

    out = jax.block_until_ready(quant_comp_forward(x, params))
    assert out.shape == x.shape

    # Tight check vs a reference that rounds matmul operands to bf16 like the
    # kernel's MXU path (f32 accumulation in both).
    ref_bf16 = reference_forward(x, params, matmul_dtype=jnp.bfloat16)
    assert jnp.allclose(out, ref_bf16, atol=2e-3, rtol=2e-3), "mismatch vs bf16-matmul reference"

    # Loose sanity check vs the full-f32 PyTorch-equivalent math.
    ref_f32 = reference_forward(x, params, matmul_dtype=jnp.float32)
    assert jnp.allclose(out, ref_f32, atol=1e-1, rtol=1e-1), "mismatch vs f32 reference"

    print("KERNEL_OK")
</pallas_src>

<mosaic_0001>
module attributes {stable_mosaic.version = 11 : i64} {
  func.func @qcm_kernel(%arg0: i32, %arg1: i32, %arg2: memref<1x154x256xf32, #tpu.memory_space<vmem>>, %arg3: memref<154x154xbf16, #tpu.memory_space<vmem>>, %arg4: memref<154x1xf32, #tpu.memory_space<vmem>>, %arg5: memref<154x154xbf16, #tpu.memory_space<vmem>>, %arg6: memref<154x1xf32, #tpu.memory_space<vmem>>, %arg7: memref<154x154xbf16, #tpu.memory_space<vmem>>, %arg8: memref<154x1xf32, #tpu.memory_space<vmem>>, %arg9: memref<1x154x256xf32, #tpu.memory_space<vmem>>) attributes {dimension_semantics = [#tpu.dimension_semantics<parallel>, #tpu.dimension_semantics<parallel>], iteration_bounds = array<i64: 2, 1>, scalar_prefetch = 0 : i64, scratch_operands = 0 : i64, tpu.core_type = #tpu.core_type<tc>, window_params = [{transform_indices = @transform_0, window_bounds = array<i64: 1, 154, 256>}, {pipeline_mode = #tpu.pipeline_mode<synchronous>, transform_indices = @transform_1, window_bounds = array<i64: 154, 154>}, {pipeline_mode = #tpu.pipeline_mode<synchronous>, transform_indices = @transform_2, window_bounds = array<i64: 154, 1>}, {pipeline_mode = #tpu.pipeline_mode<synchronous>, transform_indices = @transform_3, window_bounds = array<i64: 154, 154>}, {pipeline_mode = #tpu.pipeline_mode<synchronous>, transform_indices = @transform_4, window_bounds = array<i64: 154, 1>}, {pipeline_mode = #tpu.pipeline_mode<synchronous>, transform_indices = @transform_5, window_bounds = array<i64: 154, 154>}, {pipeline_mode = #tpu.pipeline_mode<synchronous>, transform_indices = @transform_6, window_bounds = array<i64: 154, 1>}, {transform_indices = @transform_7, window_bounds = array<i64: 1, 154, 256>}]} {
    %c0 = arith.constant 0 : index
    %c0_0 = arith.constant 0 : index
    %c0_1 = arith.constant 0 : index
    %0 = vector.load %arg2[%c0, %c0_0, %c0_1] : memref<1x154x256xf32, #tpu.memory_space<vmem>>, vector<1x154x256xf32>
    %1 = vector.shape_cast %0 : vector<1x154x256xf32> to vector<154x256xf32>
    %c0_2 = arith.constant 0 : index
    %c0_3 = arith.constant 0 : index
    %2 = vector.load %arg3[%c0_2, %c0_3] : memref<154x154xbf16, #tpu.memory_space<vmem>>, vector<154x154xbf16>
    %3 = arith.truncf %1 : vector<154x256xf32> to vector<154x256xbf16>
    %cst = arith.constant dense<0.000000e+00> : vector<154x256xf32>
    %4 = tpu.matmul %2, %3, %cst {dimension_numbers = #tpu.dot_dimension_numbers<[1], [0], [0], [1], [0, 0, 1, 1], [], []>} : vector<154x154xbf16>, vector<154x256xbf16>, vector<154x256xf32> -> vector<154x256xf32>
    %c0_4 = arith.constant 0 : index
    %c0_5 = arith.constant 0 : index
    %5 = vector.load %arg4[%c0_4, %c0_5] : memref<154x1xf32, #tpu.memory_space<vmem>>, vector<154x1xf32>
    %6 = vector.broadcast %5 : vector<154x1xf32> to vector<154x256xf32>
    %7 = arith.addf %4, %6 : vector<154x256xf32>
    %cst_6 = arith.constant 0.000000e+00 : f32
    %8 = vector.broadcast %cst_6 : f32 to vector<154x256xf32>
    %9 = arith.maximumf %7, %8 : vector<154x256xf32>
    %10 = arith.addf %9, %1 : vector<154x256xf32>
    %c0_7 = arith.constant 0 : index
    %c0_8 = arith.constant 0 : index
    %11 = vector.load %arg5[%c0_7, %c0_8] : memref<154x154xbf16, #tpu.memory_space<vmem>>, vector<154x154xbf16>
    %12 = arith.truncf %10 : vector<154x256xf32> to vector<154x256xbf16>
    %cst_9 = arith.constant dense<0.000000e+00> : vector<154x256xf32>
    %13 = tpu.matmul %11, %12, %cst_9 {dimension_numbers = #tpu.dot_dimension_numbers<[1], [0], [0], [1], [0, 0, 1, 1], [], []>} : vector<154x154xbf16>, vector<154x256xbf16>, vector<154x256xf32> -> vector<154x256xf32>
    %c0_10 = arith.constant 0 : index
    %c0_11 = arith.constant 0 : index
    %14 = vector.load %arg6[%c0_10, %c0_11] : memref<154x1xf32, #tpu.memory_space<vmem>>, vector<154x1xf32>
    %15 = vector.broadcast %14 : vector<154x1xf32> to vector<154x256xf32>
    %16 = arith.addf %13, %15 : vector<154x256xf32>
    %cst_12 = arith.constant 0.000000e+00 : f32
    %17 = vector.broadcast %cst_12 : f32 to vector<154x256xf32>
    %18 = arith.maximumf %16, %17 : vector<154x256xf32>
    %19 = arith.addf %18, %10 : vector<154x256xf32>
    %c0_13 = arith.constant 0 : index
    %c0_14 = arith.constant 0 : index
    %20 = vector.load %arg7[%c0_13, %c0_14] : memref<154x154xbf16, #tpu.memory_space<vmem>>, vector<154x154xbf16>
    %21 = arith.truncf %19 : vector<154x256xf32> to vector<154x256xbf16>
    %cst_15 = arith.constant dense<0.000000e+00> : vector<154x256xf32>
    %22 = tpu.matmul %20, %21, %cst_15 {dimension_numbers = #tpu.dot_dimension_numbers<[1], [0], [0], [1], [0, 0, 1, 1], [], []>} : vector<154x154xbf16>, vector<154x256xbf16>, vector<154x256xf32> -> vector<154x256xf32>
    %c0_16 = arith.constant 0 : index
    %c0_17 = arith.constant 0 : index
    %23 = vector.load %arg8[%c0_16, %c0_17] : memref<154x1xf32, #tpu.memory_space<vmem>>, vector<154x1xf32>
    %24 = vector.broadcast %23 : vector<154x1xf32> to vector<154x256xf32>
    %25 = arith.addf %22, %24 : vector<154x256xf32>
    %cst_18 = arith.constant 0.000000e+00 : f32
    %26 = vector.broadcast %cst_18 : f32 to vector<154x256xf32>
    %27 = arith.maximumf %25, %26 : vector<154x256xf32>
    %28 = arith.addf %27, %19 : vector<154x256xf32>
    %c0_19 = arith.constant 0 : index
    %c0_20 = arith.constant 0 : index
    %c0_21 = arith.constant 0 : index
    %29 = vector.load %arg9[%c0_19, %c0_20, %c0_21] : memref<1x154x256xf32, #tpu.memory_space<vmem>>, vector<1x154x256xf32>
    %30 = vector.shape_cast %29 : vector<1x154x256xf32> to vector<154x256xf32>
    %31 = vector.shape_cast %28 : vector<154x256xf32> to vector<1x154x256xf32>
    tpu.vector_store %arg9[%c0_19, %c0_20, %c0_21], %31 {strides = array<i32>} : memref<1x154x256xf32, #tpu.memory_space<vmem>>, vector<1x154x256xf32>,
    return
  }
  func.func @transform_0(%arg0: i32, %arg1: i32) -> (i32, i32, i32) {
    %c0_i32 = arith.constant 0 : i32
    %c0_i32_0 = arith.constant 0 : i32
    return %arg0, %c0_i32, %arg1 : i32, i32, i32
  }
  func.func @transform_1(%arg0: i32, %arg1: i32) -> (i32, i32) {
    %c0_i32 = arith.constant 0 : i32
    %c0_i32_0 = arith.constant 0 : i32
    %c0_i32_1 = arith.constant 0 : i32
    return %c0_i32, %c0_i32_0 : i32, i32
  }
  func.func @transform_2(%arg0: i32, %arg1: i32) -> (i32, i32) {
    %c0_i32 = arith.constant 0 : i32
    %c0_i32_0 = arith.constant 0 : i32
    %c0_i32_1 = arith.constant 0 : i32
    return %c0_i32, %c0_i32_0 : i32, i32
  }
  func.func @transform_3(%arg0: i32, %arg1: i32) -> (i32, i32) {
    %c0_i32 = arith.constant 0 : i32
    %c0_i32_0 = arith.constant 0 : i32
    %c0_i32_1 = arith.constant 0 : i32
    return %c0_i32, %c0_i32_0 : i32, i32
  }
  func.func @transform_4(%arg0: i32, %arg1: i32) -> (i32, i32) {
    %c0_i32 = arith.constant 0 : i32
    %c0_i32_0 = arith.constant 0 : i32
    %c0_i32_1 = arith.constant 0 : i32
    return %c0_i32, %c0_i32_0 : i32, i32
  }
  func.func @transform_5(%arg0: i32, %arg1: i32) -> (i32, i32) {
    %c0_i32 = arith.constant 0 : i32
    %c0_i32_0 = arith.constant 0 : i32
    %c0_i32_1 = arith.constant 0 : i32
    return %c0_i32, %c0_i32_0 : i32, i32
  }
  func.func @transform_6(%arg0: i32, %arg1: i32) -> (i32, i32) {
    %c0_i32 = arith.constant 0 : i32
    %c0_i32_0 = arith.constant 0 : i32
    %c0_i32_1 = arith.constant 0 : i32
    return %c0_i32, %c0_i32_0 : i32, i32
  }
  func.func @transform_7(%arg0: i32, %arg1: i32) -> (i32, i32, i32) {
    %c0_i32 = arith.constant 0 : i32
    %c0_i32_0 = arith.constant 0 : i32
    return %arg0, %c0_i32, %arg1 : i32, i32, i32
  }
}

</mosaic_0001>

<llo_original>
// kernel: tpu_custom_call.1
$region0: #{tpu_custom_call.1}
  #allocation0 [shape = 'u32[]', space=smem, size = 0x4, offset = 0x4, fixed_abs, tag = 'smem constant byte address 0x4 - core index']
  #allocation1 [shape = 'u32[144,128]{1,0:T(1,128)}', space=vmem, size = 0x12000, scoped, tag = 'internal scratch']
  %s0 = inlined_call_operand.vmem [shape: f32[2,154,256], index: 0, kind: input, shape index: {}]
  %s1 = inlined_call_operand.vmem [shape: bf16[154,154], index: 1, kind: input, shape index: {}]
  %s2 = inlined_call_operand.vmem [shape: f32[154,1], index: 2, kind: input, shape index: {}]
  %s3 = inlined_call_operand.vmem [shape: bf16[154,154], index: 3, kind: input, shape index: {}]
  %s4 = inlined_call_operand.vmem [shape: f32[154,1], index: 4, kind: input, shape index: {}]
  %s5 = inlined_call_operand.vmem [shape: bf16[154,154], index: 5, kind: input, shape index: {}]
  %s6 = inlined_call_operand.vmem [shape: f32[154,1], index: 6, kind: input, shape index: {}]
  %s7 = inlined_call_operand.vmem [shape: f32[2,154,256], index: 7, kind: output, shape index: {}]
  %s8 = sld [smem:[#allocation0]]
  $region61: #{tpu_custom_call.1} parent=0
    _
  %s10 = ssub.s32 1, %s8
  %s11 = scalar_select 0, %s10, %s8
  loop: start=0, step=1, limit=4
  $region2: #{tpu_custom_call.1} parent=0 // loop_pre_header
    _
  $region3: #{tpu_custom_call.1} parent=0 // loop_header
    %s13 = sphi 0, %s17
    %p14 = scmp.ge.s32.totalorder %s13, 4
    %s20 = sphi 0, %s32
    %s21 = sphi 0, %s28
    %s22 = sphi 0, %s20
    %s23 = sphi 0, %s21
    %s24 = sphi 0, %s22
    %s25 = sphi 0, %s23
    %s37 = sphi 0, %s39
    %s40 = sphi 0, %s37
    %s41 = sphi 0, %s40
    %s57 = sphi 0, %s41
    %s61 = sphi 0, %s61
    %s63 = sphi 0, %s61
    %s64 = sphi 0, %s63
    %s78 = sphi 0, %s64
    %s82 = sphi 0, %s82
    %s84 = sphi 0, %s82
    %s85 = sphi 0, %s84
    %s99 = sphi 0, %s85
    %s103 = sphi 0, %s103
    %s105 = sphi 0, %s103
    %s106 = sphi 0, %s105
    %s120 = sphi 0, %s106
    %s124 = sphi 0, %s124
    %s126 = sphi 0, %s124
    %s127 = sphi 0, %s126
    %s141 = sphi 0, %s127
    %s145 = sphi 0, %s145
    %s147 = sphi 0, %s145
    %s148 = sphi 0, %s147
    %s162 = sphi 0, %s148
    %s166 = sphi 0, %s166
    %s168 = sphi 0, %s166
    %s169 = sphi 0, %s168
    %s183 = sphi 0, %s169
    %s191 = sphi 0, %s193
    %s194 = sphi 0, %s191
    %s195 = sphi 0, %s194
    %s211 = sphi 0, %s195
  $region4: #{tpu_custom_call.1} parent=0 // loop_header_branch
    %16 = sbr.rel (%p14) target = $region8
  $region5: #{tpu_custom_call.1} parent=0 // loop_body
    %s18 = ssub.s32 %s13, 1
    %s19 = ssub.s32 %s13, 2
    %s26 = sadd.s32 1, %s21
    %p27 = scmp.ge.s32.totalorder %s26, 1
    %s28 = scalar_select %p27, 0, %s26
    %s29 = sadd.s32 1, %s20
    %s30 = scalar_select %p27, %s29, %s20
    %p31 = scmp.ge.s32.totalorder %s30, 2
    %s32 = scalar_select %p31, 0, %s30
    %s33 = ssub.s32 %s20, %s32
    %s34 = ssub.s32 %s21, %s28
    %s35 = sor.u32 %s33, %s34
    %p36 = scmp.eq.s32.totalorder %s35, 0
    %s38 = sadd.s32 %s37, 1
    %s39 = scalar_select %p36, %s37, %s38
    %p42 = pneg %p36
    %p43 = scmp.eq.s32.totalorder %s13, 1
    %p44 = por %p42, %p43
    %p45 = scmp.ne.s32.totalorder %s37, %s40
    %p46 = scmp.eq.s32.totalorder %s13, 0
    %p47 = por %p45, %p46
    %p48 = scmp.ne.s32.totalorder %s37, %s40
    %p49 = scmp.eq.s32.totalorder %s18, 1
    %p50 = por %p48, %p49
    %p51 = scmp.ne.s32.totalorder %s40, %s41
    %p52 = scmp.eq.s32.totalorder %s18, 0
    %p53 = por %p51, %p52
    %p54 = scmp.ne.s32.totalorder %s40, %s41
    %p55 = scmp.eq.s32.totalorder %s19, 1
    %p56 = por %p54, %p55
    %p58 = scmp.ne.s32.totalorder %s41, %s57
    %p59 = scmp.eq.s32.totalorder %s19, 0
    %p60 = por %p58, %p59
    %s62 = sadd.s32 %s61, 1
    %p65 = scmp.eq.s32.totalorder %s13, 1
    %p66 = scmp.ne.s32.totalorder %s61, %s63
    %p67 = scmp.eq.s32.totalorder %s13, 0
    %p68 = por %p66, %p67
    %p69 = scmp.ne.s32.totalorder %s61, %s63
    %p70 = scmp.eq.s32.totalorder %s18, 1
    %p71 = por %p69, %p70
    %p72 = scmp.ne.s32.totalorder %s63, %s64
    %p73 = scmp.eq.s32.totalorder %s18, 0
    %p74 = por %p72, %p73
    %p75 = scmp.ne.s32.totalorder %s63, %s64
    %p76 = scmp.eq.s32.totalorder %s19, 1
    %p77 = por %p75, %p76
    %p79 = scmp.ne.s32.totalorder %s64, %s78
    %p80 = scmp.eq.s32.totalorder %s19, 0
    %p81 = por %p79, %p80
    %s83 = sadd.s32 %s82, 1
    %p86 = scmp.eq.s32.totalorder %s13, 1
    %p87 = scmp.ne.s32.totalorder %s82, %s84
    %p88 = scmp.eq.s32.totalorder %s13, 0
    %p89 = por %p87, %p88
    %p90 = scmp.ne.s32.totalorder %s82, %s84
    %p91 = scmp.eq.s32.totalorder %s18, 1
    %p92 = por %p90, %p91
    %p93 = scmp.ne.s32.totalorder %s84, %s85
    %p94 = scmp.eq.s32.totalorder %s18, 0
    %p95 = por %p93, %p94
    %p96 = scmp.ne.s32.totalorder %s84, %s85
    %p97 = scmp.eq.s32.totalorder %s19, 1
    %p98 = por %p96, %p97
    %p100 = scmp.ne.s32.totalorder %s85, %s99
    %p101 = scmp.eq.s32.totalorder %s19, 0
    %p102 = por %p100, %p101
    %s104 = sadd.s32 %s103, 1
    %p107 = scmp.eq.s32.totalorder %s13, 1
    %p108 = scmp.ne.s32.totalorder %s103, %s105
    %p109 = scmp.eq.s32.totalorder %s13, 0
    %p110 = por %p108, %p109
    %p111 = scmp.ne.s32.totalorder %s103, %s105
    %p112 = scmp.eq.s32.totalorder %s18, 1
    %p113 = por %p111, %p112
    %p114 = scmp.ne.s32.totalorder %s105, %s106
    %p115 = scmp.eq.s32.totalorder %s18, 0
    %p116 = por %p114, %p115
    %p117 = scmp.ne.s32.totalorder %s105, %s106
    %p118 = scmp.eq.s32.totalorder %s19, 1
    %p119 = por %p117, %p118
    %p121 = scmp.ne.s32.totalorder %s106, %s120
    %p122 = scmp.eq.s32.totalorder %s19, 0
    %p123 = por %p121, %p122
    %s125 = sadd.s32 %s124, 1
    %p128 = scmp.eq.s32.totalorder %s13, 1
    %p129 = scmp.ne.s32.totalorder %s124, %s126
    %p130 = scmp.eq.s32.totalorder %s13, 0
    %p131 = por %p129, %p130
    %p132 = scmp.ne.s32.totalorder %s124, %s126
    %p133 = scmp.eq.s32.totalorder %s18, 1
    %p134 = por %p132, %p133
    %p135 = scmp.ne.s32.totalorder %s126, %s127
    %p136 = scmp.eq.s32.totalorder %s18, 0
    %p137 = por %p135, %p136
    %p138 = scmp.ne.s32.totalorder %s126, %s127
    %p139 = scmp.eq.s32.totalorder %s19, 1
    %p140 = por %p138, %p139
    %p142 = scmp.ne.s32.totalorder %s127, %s141
    %p143 = scmp.eq.s32.totalorder %s19, 0
    %p144 = por %p142, %p143
    %s146 = sadd.s32 %s145, 1
    %p149 = scmp.eq.s32.totalorder %s13, 1
    %p150 = scmp.ne.s32.totalorder %s145, %s147
    %p151 = scmp.eq.s32.totalorder %s13, 0
    %p152 = por %p150, %p151
    %p153 = scmp.ne.s32.totalorder %s145, %s147
    %p154 = scmp.eq.s32.totalorder %s18, 1
    %p155 = por %p153, %p154
    %p156 = scmp.ne.s32.totalorder %s147, %s148
    %p157 = scmp.eq.s32.totalorder %s18, 0
    %p158 = por %p156, %p157
    %p159 = scmp.ne.s32.totalorder %s147, %s148
    %p160 = scmp.eq.s32.totalorder %s19, 1
    %p161 = por %p159, %p160
    %p163 = scmp.ne.s32.totalorder %s148, %s162
    %p164 = scmp.eq.s32.totalorder %s19, 0
    %p165 = por %p163, %p164
    %s167 = sadd.s32 %s166, 1
    %p170 = scmp.eq.s32.totalorder %s13, 1
    %p171 = scmp.ne.s32.totalorder %s166, %s168
    %p172 = scmp.eq.s32.totalorder %s13, 0
    %p173 = por %p171, %p172
    %p174 = scmp.ne.s32.totalorder %s166, %s168
    %p175 = scmp.eq.s32.totalorder %s18, 1
    %p176 = por %p174, %p175
    %p177 = scmp.ne.s32.totalorder %s168, %s169
    %p178 = scmp.eq.s32.totalorder %s18, 0
    %p179 = por %p177, %p178
    %p180 = scmp.ne.s32.totalorder %s168, %s169
    %p181 = scmp.eq.s32.totalorder %s19, 1
    %p182 = por %p180, %p181
    %p184 = scmp.ne.s32.totalorder %s169, %s183
    %p185 = scmp.eq.s32.totalorder %s19, 0
    %p186 = por %p184, %p185
    %s187 = ssub.s32 %s20, %s32
    %s188 = ssub.s32 %s21, %s28
    %s189 = sor.u32 %s187, %s188
    %p190 = scmp.eq.s32.totalorder %s189, 0
    %s192 = sadd.s32 %s191, 1
    %s193 = scalar_select %p190, %s191, %s192
    %p196 = pneg %p190
    %p197 = scmp.eq.s32.totalorder %s13, 1
    %p198 = por %p196, %p197
    %p199 = scmp.ne.s32.totalorder %s191, %s194
    %p200 = scmp.eq.s32.totalorder %s13, 0
    %p201 = por %p199, %p200
    %p202 = scmp.ne.s32.totalorder %s191, %s194
    %p203 = scmp.eq.s32.totalorder %s18, 1
    %p204 = por %p202, %p203
    %p205 = scmp.ne.s32.totalorder %s194, %s195
    %p206 = scmp.eq.s32.totalorder %s18, 0
    %p207 = por %p205, %p206
    %p208 = scmp.ne.s32.totalorder %s194, %s195
    %p209 = scmp.eq.s32.totalorder %s19, 1
    %p210 = por %p208, %p209
    %p212 = scmp.ne.s32.totalorder %s195, %s211
    %p213 = scmp.eq.s32.totalorder %s19, 0
    %p214 = por %p212, %p213
    %p215 = scmp.le.s32.totalorder 1, %s13
    %p216 = scmp.lt.s32.totalorder %s13, 3
    %p217 = pnand %p215, %p216
    %p218 = pneg %p217
    // Predicated region
    $region9: #{tpu_custom_call.1} parent=5 // pred_check
      _
    $region10: #{tpu_custom_call.1} parent=5 // pred_check_branch
      %220 = sbr.rel (%p217) target = $region12
    $region11: #{tpu_custom_call.1} parent=5 // pred_region
      %s221 = ssub.s32 %s13, 1
      // Predicated region
      $region13: #{tpu_custom_call.1} parent=11 // pred_check
        %p222 = pneg %p74
      $region14: #{tpu_custom_call.1} parent=11 // pred_check_branch
        %224 = sbr.rel (%p222) target = $region16
      $region15: #{tpu_custom_call.1} parent=11 // pred_region
        _
      $region16: #{tpu_custom_call.1} parent=11 // pred_fallthru
        _
      // Predicated region
      $region17: #{tpu_custom_call.1} parent=11 // pred_check
        %p225 = pneg %p95
      $region18: #{tpu_custom_call.1} parent=11 // pred_check_branch
        %227 = sbr.rel (%p225) target = $region20
      $region19: #{tpu_custom_call.1} parent=11 // pred_region
        _
      $region20: #{tpu_custom_call.1} parent=11 // pred_fallthru
        _
      // Predicated region
      $region21: #{tpu_custom_call.1} parent=11 // pred_check
        %p228 = pneg %p116
      $region22: #{tpu_custom_call.1} parent=11 // pred_check_branch
        %230 = sbr.rel (%p228) target = $region24
      $region23: #{tpu_custom_call.1} parent=11 // pred_region
        _
      $region24: #{tpu_custom_call.1} parent=11 // pred_fallthru
        _
      // Predicated region
      $region25: #{tpu_custom_call.1} parent=11 // pred_check
        %p231 = pneg %p137
      $region26: #{tpu_custom_call.1} parent=11 // pred_check_branch
        %233 = sbr.rel (%p231) target = $region28
      $region27: #{tpu_custom_call.1} parent=11 // pred_region
        _
      $region28: #{tpu_custom_call.1} parent=11 // pred_fallthru
        _
      // Predicated region
      $region29: #{tpu_custom_call.1} parent=11 // pred_check
        %p234 = pneg %p158
      $region30: #{tpu_custom_call.1} parent=11 // pred_check_branch
        %236 = sbr.rel (%p234) target = $region32
      $region31: #{tpu_custom_call.1} parent=11 // pred_region
        _
      $region32: #{tpu_custom_call.1} parent=11 // pred_fallthru
        _
      // Predicated region
      $region33: #{tpu_custom_call.1} parent=11 // pred_check
        %p237 = pneg %p179
      $region34: #{tpu_custom_call.1} parent=11 // pred_check_branch
        %239 = sbr.rel (%p237) target = $region36
      $region35: #{tpu_custom_call.1} parent=11 // pred_region
        _
      $region36: #{tpu_custom_call.1} parent=11 // pred_fallthru
        _
    $region12: #{tpu_custom_call.1} parent=5 // pred_fallthru
      _
    %p240 = scmp.lt.s32.totalorder %s13, 2
    // Predicated region
    $region37: #{tpu_custom_call.1} parent=5 // pred_check
      %p241 = pneg %p240
    $region38: #{tpu_custom_call.1} parent=5 // pred_check_branch
      %243 = sbr.rel (%p241) target = $region40
    $region39: #{tpu_custom_call.1} parent=5 // pred_region
      // Predicated region
      $region41: #{tpu_custom_call.1} parent=39 // pred_check
        %p244 = pneg %p47
      $region42: #{tpu_custom_call.1} parent=39 // pred_check_branch
        %246 = sbr.rel (%p244) target = $region44
      $region43: #{tpu_custom_call.1} parent=39 // pred_region
        %s247 = smul.u32 2, %s21
        %p248 = scmp.lt.s32.totalorder %s20, 1
        %s249 = scalar_select %p248, %s20, 1
        %p250 = scmp.lt.s32.totalorder %s247, 1
        %s251 = scalar_select %p250, %s247, 1
        %s252 = smul.addr %s249, 40
        %s253 = sadd.s32 %s251, %s252
        %s254 = smul.addr %s253, 8
        %s255 = scalar_lea.vmem %s0, %s254
        %s256 = smul.u32 2, %s21
      $region44: #{tpu_custom_call.1} parent=39 // pred_fallthru
        _
    $region40: #{tpu_custom_call.1} parent=5 // pred_fallthru
      _
    %p257 = scmp.le.s32.totalorder 1, %s13
    %p258 = scmp.lt.s32.totalorder %s13, 3
    %p259 = pnand %p257, %p258
    %p260 = pneg %p259
    // Predicated region
    $region45: #{tpu_custom_call.1} parent=5 // pred_check
      _
    $region46: #{tpu_custom_call.1} parent=5 // pred_check_branch
      %262 = sbr.rel (%p259) target = $region48
    $region47: #{tpu_custom_call.1} parent=5 // pred_region
      %s263 = ssub.s32 %s13, 1
      %s264 = smul.u32 2, %s23
      %p265 = scmp.lt.s32.totalorder %s22, 1
      %s266 = scalar_select %p265, %s22, 1
      %p267 = scmp.lt.s32.totalorder %s264, 1
      %s268 = scalar_select %p267, %s264, 1
      %s269 = smul.addr %s266, 40
      %s270 = sadd.s32 %s268, %s269
      %s271 = smul.addr %s270, 8
      %s272 = scalar_lea.vmem %s0, %s271
      %p273 = pneg %p53
      %p274 = pneg %p50
      %p275 = pneg %p74
      %p276 = pneg %p71
      %p277 = pneg %p95
      %p278 = pneg %p92
      %p279 = pneg %p116
      %p280 = pneg %p113
      %p281 = pneg %p137
      %p282 = pneg %p134
      %p283 = pneg %p158
      %p284 = pneg %p155
      %p285 = pneg %p179
      %p286 = pneg %p176
      %p287 = pneg %p207
      %p288 = pneg %p204
      %s289 = smul.u32 2, %s23
      %p290 = scmp.lt.s32.totalorder %s22, 1
      %s291 = scalar_select %p290, %s22, 1
      %p292 = scmp.lt.s32.totalorder %s289, 1
      %s293 = scalar_select %p292, %s289, 1
      %s294 = smul.addr %s291, 40
      %s295 = sadd.s32 %s293, %s294
      %s296 = smul.addr %s295, 8
      %s297 = scalar_lea.vmem %s7, %s296
      %s298 = smul.u32 2, %s23
      %p299 = scmp.lt.s32.totalorder %s22, 1
      %s300 = scalar_select %p299, %s22, 1
      %p301 = scmp.lt.s32.totalorder %s298, 1
      %s302 = scalar_select %p301, %s298, 1
      %s303 = smul.addr %s300, 40
      %s304 = sadd.s32 %s302, %s303
      %s305 = smul.addr %s304, 8
      %s306 = scalar_lea.vmem %s0, %s305
      %s307 = smul.u32 2, %s23
      %s308 = smul.u32 2, %s23
      %p309 = scmp.lt.s32.totalorder %s22, 1
      %s310 = scalar_select %p309, %s22, 1
      %p311 = scmp.lt.s32.totalorder %s308, 1
      %s312 = scalar_select %p311, %s308, 1
      %s313 = smul.addr %s310, 40
      %s314 = sadd.s32 %s312, %s313
      %s315 = smul.addr %s314, 8
      %s316 = scalar_lea.vmem %s7, %s315
      %s317 = smul.u32 2, %s23
      %v319 = vld [vmem:[%s306] sm:$0xff]
      %v320 = vld [vmem:[%s306 + $0x8] sm:$0xff]
      %v321 = vld [vmem:[%s306 + $0x10] sm:$0xff]
      %v322 = vld [vmem:[%s306 + $0x18] sm:$0xff]
      %v323 = vld [vmem:[%s306 + $0x20] sm:$0xff]
      %v324 = vld [vmem:[%s306 + $0x28] sm:$0xff]
      %v325 = vld [vmem:[%s306 + $0x30] sm:$0xff]
      %v326 = vld [vmem:[%s306 + $0x38] sm:$0xff]
      %v327 = vld [vmem:[%s306 + $0x40] sm:$0xff]
      %v328 = vld [vmem:[%s306 + $0x48] sm:$0xff]
      %v329 = vld [vmem:[%s306 + $0x50] sm:$0xff]
      %v330 = vld [vmem:[%s306 + $0x58] sm:$0xff]
      %v331 = vld [vmem:[%s306 + $0x60] sm:$0xff]
      %v332 = vld [vmem:[%s306 + $0x68] sm:$0xff]
      %v333 = vld [vmem:[%s306 + $0x70] sm:$0xff]
      %v334 = vld [vmem:[%s306 + $0x78] sm:$0xff]
      %v335 = vld [vmem:[%s306 + $0x80] sm:$0xff]
      %v336 = vld [vmem:[%s306 + $0x88] sm:$0xff]
      %v337 = vld [vmem:[%s306 + $0x90] sm:$0xff]
      %v338 = vld [vmem:[%s306 + $0x98] sm:$0xff]
      %v339 = vld [vmem:[%s306 + $0xa0] sm:$0xff]
      %v340 = vld [vmem:[%s306 + $0xa8] sm:$0xff]
      %v341 = vld [vmem:[%s306 + $0xb0] sm:$0xff]
      %v342 = vld [vmem:[%s306 + $0xb8] sm:$0xff]
      %v343 = vld [vmem:[%s306 + $0xc0] sm:$0xff]
      %v344 = vld [vmem:[%s306 + $0xc8] sm:$0xff]
      %v345 = vld [vmem:[%s306 + $0xd0] sm:$0xff]
      %v346 = vld [vmem:[%s306 + $0xd8] sm:$0xff]
      %v347 = vld [vmem:[%s306 + $0xe0] sm:$0xff]
      %v348 = vld [vmem:[%s306 + $0xe8] sm:$0xff]
      %v349 = vld [vmem:[%s306 + $0xf0] sm:$0xff]
      %v350 = vld [vmem:[%s306 + $0xf8] sm:$0xff]
      %v351 = vld [vmem:[%s306 + $0x100] sm:$0xff]
      %v352 = vld [vmem:[%s306 + $0x108] sm:$0xff]
      %v353 = vld [vmem:[%s306 + $0x110] sm:$0xff]
      %v354 = vld [vmem:[%s306 + $0x118] sm:$0xff]
      %v355 = vld [vmem:[%s306 + $0x120] sm:$0xff]
      %v356 = vld [vmem:[%s306 + $0x128] sm:$0xff]
      %v357 = vld [vmem:[%s306 + $0x130] sm:$0x3]
      %v358 = vld [vmem:[%s306 + $0x138] sm:$0x3]
      %v359 = vld [vmem:[%s1] sm:$0xff]
      %v360 = vld [vmem:[%s1 + $0x8] sm:$0xff]
      %v361 = vld [vmem:[%s1 + $0x10] sm:$0xff]
      %v362 = vld [vmem:[%s1 + $0x18] sm:$0xff]
      %v363 = vld [vmem:[%s1 + $0x20] sm:$0xff]
      %v364 = vld [vmem:[%s1 + $0x28] sm:$0xff]
      %v365 = vld [vmem:[%s1 + $0x30] sm:$0xff]
      %v366 = vld [vmem:[%s1 + $0x38] sm:$0xff]
      %v367 = vld [vmem:[%s1 + $0x40] sm:$0xff]
      %v368 = vld [vmem:[%s1 + $0x48] sm:$0xff]
      %v369 = vld [vmem:[%s1 + $0x50] sm:$0xff]
      %v370 = vld [vmem:[%s1 + $0x58] sm:$0xff]
      %v371 = vld [vmem:[%s1 + $0x60] sm:$0xff]
      %v372 = vld [vmem:[%s1 + $0x68] sm:$0xff]
      %v373 = vld [vmem:[%s1 + $0x70] sm:$0xff]
      %v374 = vld [vmem:[%s1 + $0x78] sm:$0xff]
      %v375 = vld [vmem:[%s1 + $0x80] sm:$0xff]
      %v376 = vld [vmem:[%s1 + $0x88] sm:$0xff]
      %v377 = vld [vmem:[%s1 + $0x90] sm:$0xff]
      %v378 = vld [vmem:[%s1 + $0x98] sm:$0x11]
      %v379 = vpack.c.bf16 %v321, %v319
      %v380 = vpack.c.bf16 %v322, %v320
      %v381 = vpack.c.bf16 %v325, %v323
      %v382 = vpack.c.bf16 %v326, %v324
      %v383 = vpack.c.bf16 %v329, %v327
      %v384 = vpack.c.bf16 %v330, %v328
      %v385 = vpack.c.bf16 %v333, %v331
      %v386 = vpack.c.bf16 %v334, %v332
      %v387 = vpack.c.bf16 %v337, %v335
      %v388 = vpack.c.bf16 %v338, %v336
      %v389 = vpack.c.bf16 %v341, %v339
      %v390 = vpack.c.bf16 %v342, %v340
      %v391 = vpack.c.bf16 %v345, %v343
      %v392 = vpack.c.bf16 %v346, %v344
      %v393 = vpack.c.bf16 %v349, %v347
      %v394 = vpack.c.bf16 %v350, %v348
      %v395 = vpack.c.bf16 %v353, %v351
      %v396 = vpack.c.bf16 %v354, %v352
      %v397 = vpack.c.bf16 %v357, %v355
      %v398 = vpack.c.bf16 %v358, %v356
      %v399 = vld [vmem:[%s2] sm:$0xff]
      %v400 = vld [vmem:[%s2 + $0x8] sm:$0xff]
      %v401 = vld [vmem:[%s2 + $0x10] sm:$0xff]
      %v402 = vld [vmem:[%s2 + $0x18] sm:$0xff]
      %v403 = vld [vmem:[%s2 + $0x20] sm:$0xff]
      %v404 = vld [vmem:[%s2 + $0x28] sm:$0xff]
      %v405 = vld [vmem:[%s2 + $0x30] sm:$0xff]
      %v406 = vld [vmem:[%s2 + $0x38] sm:$0xff]
      %v407 = vld [vmem:[%s2 + $0x40] sm:$0xff]
      %v408 = vld [vmem:[%s2 + $0x48] sm:$0xff]
      %v409 = vld [vmem:[%s2 + $0x50] sm:$0xff]
      %v410 = vld [vmem:[%s2 + $0x58] sm:$0xff]
      %v411 = vld [vmem:[%s2 + $0x60] sm:$0xff]
      %v412 = vld [vmem:[%s2 + $0x68] sm:$0xff]
      %v413 = vld [vmem:[%s2 + $0x70] sm:$0xff]
      %v414 = vld [vmem:[%s2 + $0x78] sm:$0xff]
      %v415 = vld [vmem:[%s2 + $0x80] sm:$0xff]
      %v416 = vld [vmem:[%s2 + $0x88] sm:$0xff]
      %v417 = vld [vmem:[%s2 + $0x90] sm:$0xff]
      %v418 = vld [vmem:[%s2 + $0x98] sm:$0x3]
      %420 = vset.pattern.permute.xlu0 0
      %421 = vperm.xlu0 %420, %v399
      %v422 = vpop.permute.xlu0 %421
      %425 = vset.pattern.permute.xlu0 0
      %426 = vperm.xlu0 %425, %v400
      %v427 = vpop.permute.xlu0 %426
      %430 = vset.pattern.permute.xlu0 0
      %431 = vperm.xlu0 %430, %v401
      %v432 = vpop.permute.xlu0 %431
      %435 = vset.pattern.permute.xlu0 0
      %436 = vperm.xlu0 %435, %v402
      %v437 = vpop.permute.xlu0 %436
      %440 = vset.pattern.permute.xlu0 0
      %441 = vperm.xlu0 %440, %v403
      %v442 = vpop.permute.xlu0 %441
      %445 = vset.pattern.permute.xlu0 0
      %446 = vperm.xlu0 %445, %v404
      %v447 = vpop.permute.xlu0 %446
      %450 = vset.pattern.permute.xlu0 0
      %451 = vperm.xlu0 %450, %v405
      %v452 = vpop.permute.xlu0 %451
      %455 = vset.pattern.permute.xlu0 0
      %456 = vperm.xlu0 %455, %v406
      %v457 = vpop.permute.xlu0 %456
      %460 = vset.pattern.permute.xlu0 0
      %461 = vperm.xlu0 %460, %v407
      %v462 = vpop.permute.xlu0 %461
      %465 = vset.pattern.permute.xlu0 0
      %466 = vperm.xlu0 %465, %v408
      %v467 = vpop.permute.xlu0 %466
      %470 = vset.pattern.permute.xlu0 0
      %471 = vperm.xlu0 %470, %v409
      %v472 = vpop.permute.xlu0 %471
      %475 = vset.pattern.permute.xlu0 0
      %476 = vperm.xlu0 %475, %v410
      %v477 = vpop.permute.xlu0 %476
      %480 = vset.pattern.permute.xlu0 0
      %481 = vperm.xlu0 %480, %v411
      %v482 = vpop.permute.xlu0 %481
      %485 = vset.pattern.permute.xlu0 0
      %486 = vperm.xlu0 %485, %v412
      %v487 = vpop.permute.xlu0 %486
      %490 = vset.pattern.permute.xlu0 0
      %491 = vperm.xlu0 %490, %v413
      %v492 = vpop.permute.xlu0 %491
      %495 = vset.pattern.permute.xlu0 0
      %496 = vperm.xlu0 %495, %v414
      %v497 = vpop.permute.xlu0 %496
      %500 = vset.pattern.permute.xlu0 0
      %501 = vperm.xlu0 %500, %v415
      %v502 = vpop.permute.xlu0 %501
      %505 = vset.pattern.permute.xlu0 0
      %506 = vperm.xlu0 %505, %v416
      %v507 = vpop.permute.xlu0 %506
      %510 = vset.pattern.permute.xlu0 0
      %511 = vperm.xlu0 %510, %v417
      %v512 = vpop.permute.xlu0 %511
      %515 = vset.pattern.permute.xlu0 0
      %516 = vperm.xlu0 %515, %v418
      %v517 = vpop.permute.xlu0 %516
      %v539 = vunpack.c.l.b16 %v359
      %v540 = vunpack.c.h.b16 %v359
      %v541 = vunpack.c.l.b16 %v360
      %v542 = vunpack.c.h.b16 %v360
      %v543 = vunpack.c.l.b16 %v361
      %v544 = vunpack.c.h.b16 %v361
      %v545 = vunpack.c.l.b16 %v362
      %v546 = vunpack.c.h.b16 %v362
      %v547 = vunpack.c.l.b16 %v363
      %v548 = vunpack.c.h.b16 %v363
      %v549 = vunpack.c.l.b16 %v364
      %v550 = vunpack.c.h.b16 %v364
      %v551 = vunpack.c.l.b16 %v365
      %v552 = vunpack.c.h.b16 %v365
      %v553 = vunpack.c.l.b16 %v366
      %v554 = vunpack.c.h.b16 %v366
      %v555 = vunpack.c.l.b16 %v367
      %v556 = vunpack.c.h.b16 %v367
      %v557 = vunpack.c.l.b16 %v368
      %v558 = vunpack.c.h.b16 %v368
      %v559 = vunpack.c.l.b16 %v369
      %v560 = vunpack.c.h.b16 %v369
      %v561 = vunpack.c.l.b16 %v370
      %v562 = vunpack.c.h.b16 %v370
      %v563 = vunpack.c.l.b16 %v371
      %v564 = vunpack.c.h.b16 %v371
      %v565 = vunpack.c.l.b16 %v372
      %v566 = vunpack.c.h.b16 %v372
      %v567 = vunpack.c.l.b16 %v373
      %v568 = vunpack.c.h.b16 %v373
      %v569 = vunpack.c.l.b16 %v374
      %v570 = vunpack.c.h.b16 %v374
      %v571 = vunpack.c.l.b16 %v375
      %v572 = vunpack.c.h.b16 %v375
      %v573 = vunpack.c.l.b16 %v376
      %v574 = vunpack.c.h.b16 %v376
      %v575 = vunpack.c.l.b16 %v377
      %v576 = vunpack.c.h.b16 %v377
      %v577 = vunpack.c.l.b16 %v378
      %v578 = vunpack.c.h.b16 %v378
      %v579 = vpack.c.b16 %v541, %v539
      %v580 = vpack.c.b16 %v542, %v540
      %v581 = vpack.c.b16 %v545, %v543
      %v582 = vpack.c.b16 %v546, %v544
      %v583 = vpack.c.b16 %v549, %v547
      %v584 = vpack.c.b16 %v550, %v548
      %v585 = vpack.c.b16 %v553, %v551
      %v586 = vpack.c.b16 %v554, %v552
      %v587 = vpack.c.b16 %v557, %v555
      %v588 = vpack.c.b16 %v558, %v556
      %v589 = vpack.c.b16 %v561, %v559
      %v590 = vpack.c.b16 %v562, %v560
      %v591 = vpack.c.b16 %v565, %v563
      %v592 = vpack.c.b16 %v566, %v564
      %v593 = vpack.c.b16 %v569, %v567
      %v594 = vpack.c.b16 %v570, %v568
      %v595 = vpack.c.b16 %v573, %v571
      %v596 = vpack.c.b16 %v574, %v572
      %v597 = vpack.c.b16 %v577, %v575
      %v598 = vpack.c.b16 %v578, %v576
      %vm609 = vcmask 211968
      %v611 = vsel %vm609, %v580, 0
      %v614 = vsel %vm609, %v582, 0
      %v617 = vsel %vm609, %v584, 0
      %v620 = vsel %vm609, %v586, 0
      %v623 = vsel %vm609, %v588, 0
      %v626 = vsel %vm609, %v590, 0
      %v629 = vsel %vm609, %v592, 0
      %v632 = vsel %vm609, %v594, 0
      %v635 = vsel %vm609, %v596, 0
      %v638 = vsel %vm609, %v598, 0
      %vm640 = vcmask 1044480
      %v642 = vsel %vm640, %v397, 0
      %v645 = vsel %vm640, %v398, 0
      %647 = vmatprep.subr.bf16.mxu0 %v380
      %648 = vmatpush1.bf16.msra.mxu0 %v379
      %649 = vmatprep.subr.bf16.mxu0 %v382
      %650 = vmatpush1.bf16.msra.mxu0 %v381
      %651 = vmatprep.subr.bf16.mxu0 %v384
      %652 = vmatpush1.bf16.msra.mxu0 %v383
      %653 = vmatprep.subr.bf16.mxu0 %v386
      %654 = vmatpush1.bf16.msra.mxu0 %v385
      %655 = vmatprep.subr.bf16.mxu0 %v388
      %656 = vmatpush1.bf16.msra.mxu0 %v387
      %657 = vmatprep.subr.bf16.mxu0 %v390
      %658 = vmatpush1.bf16.msra.mxu0 %v389
      %659 = vmatprep.subr.bf16.mxu0 %v392
      %660 = vmatpush1.bf16.msra.mxu0 %v391
      %661 = vmatprep.subr.bf16.mxu0 %v394
      %662 = vmatpush1.bf16.msra.mxu0 %v393
      %663 = vmatprep.subr.bf16.mxu0 %v396
      %664 = vmatpush1.bf16.msra.mxu0 %v395
      %665 = vmatprep.subr.bf16.mxu0 %v645
      %666 = vmatpush1.bf16.msra.mxu0 %v642
      %667 = vmatprep.subr.bf16.mxu0 0
      %668 = vmatpush1.bf16.msra.mxu0 0
      %669 = vmatprep.subr.bf16.mxu0 0
      %670 = vmatpush1.bf16.msra.mxu0 0
      %671 = vmatprep.subr.bf16.mxu0 0
      %672 = vmatpush1.bf16.msra.mxu0 0
      %673 = vmatprep.subr.bf16.mxu0 0
      %674 = vmatpush1.bf16.msra.mxu0 0
      %675 = vmatprep.subr.bf16.mxu0 0
      %676 = vmatpush1.bf16.msra.mxu0 0
      %677 = vmatprep.subr.bf16.mxu0 0
      %678 = vmatpush1.bf16.msra.mxu0 0
      %679 = vmatprep.mubr.bf16.mxu0 %v611
      %680 = vmatmul.mubr.bf16.gmra.mrb[0].mxu0 %v579
      %v681 = vpop.f32.mrb[0].mxu0
      %v682 = vadd.f32 %v422, %v681
      %v683 = vpop.f32.mrb[0].mxu0
      %v684 = vadd.f32 %v422, %v683
      %v685 = vpop.f32.mrb[0].mxu0
      %v686 = vadd.f32 %v427, %v685
      %v687 = vpop.f32.mrb[0].mxu0
      %v688 = vadd.f32 %v427, %v687
      %689 = vmatprep.mubr.bf16.mxu0 %v614
      %690 = vmatmul.mubr.bf16.gmra.mrb[0].mxu0 %v581
      %v691 = vpop.f32.mrb[0].mxu0
      %v692 = vadd.f32 %v432, %v691
      %v693 = vpop.f32.mrb[0].mxu0
      %v694 = vadd.f32 %v432, %v693
      %v695 = vpop.f32.mrb[0].mxu0
      %v696 = vadd.f32 %v437, %v695
      %v697 = vpop.f32.mrb[0].mxu0
      %v698 = vadd.f32 %v437, %v697
      %699 = vmatprep.mubr.bf16.mxu0 %v617
      %700 = vmatmul.mubr.bf16.gmra.mrb[0].mxu0 %v583
      %v701 = vpop.f32.mrb[0].mxu0
      %v702 = vadd.f32 %v442, %v701
      %v703 = vpop.f32.mrb[0].mxu0
      %v704 = vadd.f32 %v442, %v703
      %v705 = vpop.f32.mrb[0].mxu0
      %v706 = vadd.f32 %v447, %v705
      %v707 = vpop.f32.mrb[0].mxu0
      %v708 = vadd.f32 %v447, %v707
      %709 = vmatprep.mubr.bf16.mxu0 %v620
      %710 = vmatmul.mubr.bf16.gmra.mrb[0].mxu0 %v585
      %v711 = vpop.f32.mrb[0].mxu0
      %v712 = vadd.f32 %v452, %v711
      %v713 = vpop.f32.mrb[0].mxu0
      %v714 = vadd.f32 %v452, %v713
      %v715 = vpop.f32.mrb[0].mxu0
      %v716 = vadd.f32 %v457, %v715
      %v717 = vpop.f32.mrb[0].mxu0
      %v718 = vadd.f32 %v457, %v717
      %719 = vmatprep.mubr.bf16.mxu0 %v623
      %720 = vmatmul.mubr.bf16.gmra.mrb[0].mxu0 %v587
      %v721 = vpop.f32.mrb[0].mxu0
      %v722 = vadd.f32 %v462, %v721
      %v723 = vpop.f32.mrb[0].mxu0
      %v724 = vadd.f32 %v462, %v723
      %v725 = vpop.f32.mrb[0].mxu0
      %v726 = vadd.f32 %v467, %v725
      %v727 = vpop.f32.mrb[0].mxu0
      %v728 = vadd.f32 %v467, %v727
      %729 = vmatprep.mubr.bf16.mxu0 %v626
      %730 = vmatmul.mubr.bf16.gmra.mrb[0].mxu0 %v589
      %v731 = vpop.f32.mrb[0].mxu0
      %v732 = vadd.f32 %v472, %v731
      %v733 = vpop.f32.mrb[0].mxu0
      %v734 = vadd.f32 %v472, %v733
      %v735 = vpop.f32.mrb[0].mxu0
      %v736 = vadd.f32 %v477, %v735
      %v737 = vpop.f32.mrb[0].mxu0
      %v738 = vadd.f32 %v477, %v737
      %739 = vmatprep.mubr.bf16.mxu0 %v629
      %740 = vmatmul.mubr.bf16.gmra.mrb[0].mxu0 %v591
      %v741 = vpop.f32.mrb[0].mxu0
      %v742 = vadd.f32 %v482, %v741
      %v743 = vpop.f32.mrb[0].mxu0
      %v744 = vadd.f32 %v482, %v743
      %v745 = vpop.f32.mrb[0].mxu0
      %v746 = vadd.f32 %v487, %v745
      %v747 = vpop.f32.mrb[0].mxu0
      %v748 = vadd.f32 %v487, %v747
      %749 = vmatprep.mubr.bf16.mxu0 %v632
      %750 = vmatmul.mubr.bf16.gmra.mrb[0].mxu0 %v593
      %v751 = vpop.f32.mrb[0].mxu0
      %v752 = vadd.f32 %v492, %v751
      %v753 = vpop.f32.mrb[0].mxu0
      %v754 = vadd.f32 %v492, %v753
      %v755 = vpop.f32.mrb[0].mxu0
      %v756 = vadd.f32 %v497, %v755
      %v757 = vpop.f32.mrb[0].mxu0
      %v758 = vadd.f32 %v497, %v757
      %759 = vmatprep.mubr.bf16.mxu0 %v635
      %760 = vmatmul.mubr.bf16.gmra.mrb[0].mxu0 %v595
      %v761 = vpop.f32.mrb[0].mxu0
      %v762 = vadd.f32 %v502, %v761
      %v763 = vpop.f32.mrb[0].mxu0
      %v764 = vadd.f32 %v502, %v763
      %v765 = vpop.f32.mrb[0].mxu0
      %v766 = vadd.f32 %v507, %v765
      %v767 = vpop.f32.mrb[0].mxu0
      %v768 = vadd.f32 %v507, %v767
      %769 = vmatprep.mubr.bf16.mxu0 %v638
      %770 = vmatmul.mubr.bf16.gmra.mrb[0].mxu0 %v597
      %v771 = vpop.f32.mrb[0].mxu0
      %v772 = vadd.f32 %v512, %v771
      %v773 = vpop.f32.mrb[0].mxu0
      %v774 = vadd.f32 %v512, %v773
      %v775 = vpop.f32.mrb[0].mxu0
      %v776 = vadd.f32 %v517, %v775
      %v777 = vpop.f32.mrb[0].mxu0
      %v778 = vadd.f32 %v517, %v777
      %779 = vdwg.mxu0
      %v780 = vmax.f32 %v682, 0.0
      %v781 = vmax.f32 %v684, 0.0
      %v782 = vmax.f32 %v686, 0.0
      %v783 = vmax.f32 %v688, 0.0
      %v784 = vmax.f32 %v692, 0.0
      %v785 = vmax.f32 %v694, 0.0
      %v786 = vmax.f32 %v696, 0.0
      %v787 = vmax.f32 %v698, 0.0
      %v788 = vmax.f32 %v702, 0.0
      %v789 = vmax.f32 %v704, 0.0
      %v790 = vmax.f32 %v706, 0.0
      %v791 = vmax.f32 %v708, 0.0
      %v792 = vmax.f32 %v712, 0.0
      %v793 = vmax.f32 %v714, 0.0
      %v794 = vmax.f32 %v716, 0.0
      %v795 = vmax.f32 %v718, 0.0
      %v796 = vmax.f32 %v722, 0.0
      %v797 = vmax.f32 %v724, 0.0
      %v798 = vmax.f32 %v726, 0.0
      %v799 = vmax.f32 %v728, 0.0
      %v800 = vmax.f32 %v732, 0.0
      %v801 = vmax.f32 %v734, 0.0
      %v802 = vmax.f32 %v736, 0.0
      %v803 = vmax.f32 %v738, 0.0
      %v804 = vmax.f32 %v742, 0.0
      %v805 = vmax.f32 %v744, 0.0
      %v806 = vmax.f32 %v746, 0.0
      %v807 = vmax.f32 %v748, 0.0
      %v808 = vmax.f32 %v752, 0.0
      %v809 = vmax.f32 %v754, 0.0
      %v810 = vmax.f32 %v756, 0.0
      %v811 = vmax.f32 %v758, 0.0
      %v812 = vmax.f32 %v762, 0.0
      %v813 = vmax.f32 %v764, 0.0
      %v814 = vmax.f32 %v766, 0.0
      %v815 = vmax.f32 %v768, 0.0
      %v816 = vmax.f32 %v772, 0.0
      %v817 = vmax.f32 %v774, 0.0
      %v818 = vmax.f32 %v776, 0.0
      %v819 = vmax.f32 %v778, 0.0
      %v820 = vadd.f32 %v780, %v319
      %v821 = vadd.f32 %v781, %v320
      %v822 = vadd.f32 %v782, %v321
      %v823 = vadd.f32 %v783, %v322
      %v824 = vadd.f32 %v784, %v323
      %v825 = vadd.f32 %v785, %v324
      %v826 = vadd.f32 %v786, %v325
      %v827 = vadd.f32 %v787, %v326
      %v828 = vadd.f32 %v788, %v327
      %v829 = vadd.f32 %v789, %v328
      %v830 = vadd.f32 %v790, %v329
      %v831 = vadd.f32 %v791, %v330
      %v832 = vadd.f32 %v792, %v331
      %v833 = vadd.f32 %v793, %v332
      %v834 = vadd.f32 %v794, %v333
      %v835 = vadd.f32 %v795, %v334
      %v836 = vadd.f32 %v796, %v335
      %v837 = vadd.f32 %v797, %v336
      %v838 = vadd.f32 %v798, %v337
      %v839 = vadd.f32 %v799, %v338
      %v840 = vadd.f32 %v800, %v339
      %v841 = vadd.f32 %v801, %v340
      %v842 = vadd.f32 %v802, %v341
      %v843 = vadd.f32 %v803, %v342
      %v844 = vadd.f32 %v804, %v343
      %v845 = vadd.f32 %v805, %v344
      %v846 = vadd.f32 %v806, %v345
      %v847 = vadd.f32 %v807, %v346
      %v848 = vadd.f32 %v808, %v347
      %v849 = vadd.f32 %v809, %v348
      %v850 = vadd.f32 %v810, %v349
      %v851 = vadd.f32 %v811, %v350
      %v852 = vadd.f32 %v812, %v351
      %v853 = vadd.f32 %v813, %v352
      %v854 = vadd.f32 %v814, %v353
      %v855 = vadd.f32 %v815, %v354
      %v856 = vadd.f32 %v816, %v355
      %v857 = vadd.f32 %v817, %v356
      %v858 = vadd.f32 %v818, %v357
      %v859 = vadd.f32 %v819, %v358
      %v860 = vld [vmem:[%s3] sm:$0xff]
      %v861 = vld [vmem:[%s3 + $0x8] sm:$0xff]
      %v862 = vld [vmem:[%s3 + $0x10] sm:$0xff]
      %v863 = vld [vmem:[%s3 + $0x18] sm:$0xff]
      %v864 = vld [vmem:[%s3 + $0x20] sm:$0xff]
      %v865 = vld [vmem:[%s3 + $0x28] sm:$0xff]
      %v866 = vld [vmem:[%s3 + $0x30] sm:$0xff]
      %v867 = vld [vmem:[%s3 + $0x38] sm:$0xff]
      %v868 = vld [vmem:[%s3 + $0x40] sm:$0xff]
      %v869 = vld [vmem:[%s3 + $0x48] sm:$0xff]
      %v870 = vld [vmem:[%s3 + $0x50] sm:$0xff]
      %v871 = vld [vmem:[%s3 + $0x58] sm:$0xff]
      %v872 = vld [vmem:[%s3 + $0x60] sm:$0xff]
      %v873 = vld [vmem:[%s3 + $0x68] sm:$0xff]
      %v874 = vld [vmem:[%s3 + $0x70] sm:$0xff]
      %v875 = vld [vmem:[%s3 + $0x78] sm:$0xff]
      %v876 = vld [vmem:[%s3 + $0x80] sm:$0xff]
      %v877 = vld [vmem:[%s3 + $0x88] sm:$0xff]
      %v878 = vld [vmem:[%s3 + $0x90] sm:$0xff]
      %v879 = vld [vmem:[%s3 + $0x98] sm:$0x11]
      %v880 = vpack.c.bf16 %v822, %v820
      %v881 = vpack.c.bf16 %v823, %v821
      %v882 = vpack.c.bf16 %v826, %v824
      %v883 = vpack.c.bf16 %v827, %v825
      %v884 = vpack.c.bf16 %v830, %v828
      %v885 = vpack.c.bf16 %v831, %v829
      %v886 = vpack.c.bf16 %v834, %v832
      %v887 = vpack.c.bf16 %v835, %v833
      %v888 = vpack.c.bf16 %v838, %v836
      %v889 = vpack.c.bf16 %v839, %v837
      %v890 = vpack.c.bf16 %v842, %v840
      %v891 = vpack.c.bf16 %v843, %v841
      %v892 = vpack.c.bf16 %v846, %v844
      %v893 = vpack.c.bf16 %v847, %v845
      %v894 = vpack.c.bf16 %v850, %v848
      %v895 = vpack.c.bf16 %v851, %v849
      %v896 = vpack.c.bf16 %v854, %v852
      %v897 = vpack.c.bf16 %v855, %v853
      %v898 = vpack.c.bf16 %v858, %v856
      %v899 = vpack.c.bf16 %v859, %v857
      %v900 = vld [vmem:[%s4] sm:$0xff]
      %v901 = vld [vmem:[%s4 + $0x8] sm:$0xff]
      %v902 = vld [vmem:[%s4 + $0x10] sm:$0xff]
      %v903 = vld [vmem:[%s4 + $0x18] sm:$0xff]
      %v904 = vld [vmem:[%s4 + $0x20] sm:$0xff]
      %v905 = vld [vmem:[%s4 + $0x28] sm:$0xff]
      %v906 = vld [vmem:[%s4 + $0x30] sm:$0xff]
      %v907 = vld [vmem:[%s4 + $0x38] sm:$0xff]
      %v908 = vld [vmem:[%s4 + $0x40] sm:$0xff]
      %v909 = vld [vmem:[%s4 + $0x48] sm:$0xff]
      %v910 = vld [vmem:[%s4 + $0x50] sm:$0xff]
      %v911 = vld [vmem:[%s4 + $0x58] sm:$0xff]
      %v912 = vld [vmem:[%s4 + $0x60] sm:$0xff]
      %v913 = vld [vmem:[%s4 + $0x68] sm:$0xff]
      %v914 = vld [vmem:[%s4 + $0x70] sm:$0xff]
      %v915 = vld [vmem:[%s4 + $0x78] sm:$0xff]
      %v916 = vld [vmem:[%s4 + $0x80] sm:$0xff]
      %v917 = vld [vmem:[%s4 + $0x88] sm:$0xff]
      %v918 = vld [vmem:[%s4 + $0x90] sm:$0xff]
      %v919 = vld [vmem:[%s4 + $0x98] sm:$0x3]
      %921 = vset.pattern.permute.xlu0 0
      %922 = vperm.xlu0 %921, %v900
      %v923 = vpop.permute.xlu0 %922
      %926 = vset.pattern.permute.xlu0 0
      %927 = vperm.xlu0 %926, %v901
      %v928 = vpop.permute.xlu0 %927
      %931 = vset.pattern.permute.xlu0 0
      %932 = vperm.xlu0 %931, %v902
      %v933 = vpop.permute.xlu0 %932
      %936 = vset.pattern.permute.xlu0 0
      %937 = vperm.xlu0 %936, %v903
      %v938 = vpop.permute.xlu0 %937
      %941 = vset.pattern.permute.xlu0 0
      %942 = vperm.xlu0 %941, %v904
      %v943 = vpop.permute.xlu0 %942
      %946 = vset.pattern.permute.xlu0 0
      %947 = vperm.xlu0 %946, %v905
      %v948 = vpop.permute.xlu0 %947
      %951 = vset.pattern.permute.xlu0 0
      %952 = vperm.xlu0 %951, %v906
      %v953 = vpop.permute.xlu0 %952
      %956 = vset.pattern.permute.xlu0 0
      %957 = vperm.xlu0 %956, %v907
      %v958 = vpop.permute.xlu0 %957
      %961 = vset.pattern.permute.xlu0 0
      %962 = vperm.xlu0 %961, %v908
      %v963 = vpop.permute.xlu0 %962
      %966 = vset.pattern.permute.xlu0 0
      %967 = vperm.xlu0 %966, %v909
      %v968 = vpop.permute.xlu0 %967
      %971 = vset.pattern.permute.xlu0 0
      %972 = vperm.xlu0 %971, %v910
      %v973 = vpop.permute.xlu0 %972
      %976 = vset.pattern.permute.xlu0 0
      %977 = vperm.xlu0 %976, %v911
      %v978 = vpop.permute.xlu0 %977
      %981 = vset.pattern.permute.xlu0 0
      %982 = vperm.xlu0 %981, %v912
      %v983 = vpop.permute.xlu0 %982
      %986 = vset.pattern.permute.xlu0 0
      %987 = vperm.xlu0 %986, %v913
      %v988 = vpop.permute.xlu0 %987
      %991 = vset.pattern.permute.xlu0 0
      %992 = vperm.xlu0 %991, %v914
      %v993 = vpop.permute.xlu0 %992
      %996 = vset.pattern.permute.xlu0 0
      %997 = vperm.xlu0 %996, %v915
      %v998 = vpop.permute.xlu0 %997
      %1001 = vset.pattern.permute.xlu0 0
      %1002 = vperm.xlu0 %1001, %v916
      %v1003 = vpop.permute.xlu0 %1002
      %1006 = vset.pattern.permute.xlu0 0
      %1007 = vperm.xlu0 %1006, %v917
      %v1008 = vpop.permute.xlu0 %1007
      %1011 = vset.pattern.permute.xlu0 0
      %1012 = vperm.xlu0 %1011, %v918
      %v1013 = vpop.permute.xlu0 %1012
      %1016 = vset.pattern.permute.xlu0 0
      %1017 = vperm.xlu0 %1016, %v919
      %v1018 = vpop.permute.xlu0 %1017
      %v1040 = vunpack.c.l.b16 %v860
      %v1041 = vunpack.c.h.b16 %v860
      %v1042 = vunpack.c.l.b16 %v861
      %v1043 = vunpack.c.h.b16 %v861
      %v1044 = vunpack.c.l.b16 %v862
      %v1045 = vunpack.c.h.b16 %v862
      %v1046 = vunpack.c.l.b16 %v863
      %v1047 = vunpack.c.h.b16 %v863
      %v1048 = vunpack.c.l.b16 %v864
      %v1049 = vunpack.c.h.b16 %v864
      %v1050 = vunpack.c.l.b16 %v865
      %v1051 = vunpack.c.h.b16 %v865
      %v1052 = vunpack.c.l.b16 %v866
      %v1053 = vunpack.c.h.b16 %v866
      %v1054 = vunpack.c.l.b16 %v867
      %v1055 = vunpack.c.h.b16 %v867
      %v1056 = vunpack.c.l.b16 %v868
      %v1057 = vunpack.c.h.b16 %v868
      %v1058 = vunpack.c.l.b16 %v869
      %v1059 = vunpack.c.h.b16 %v869
      %v1060 = vunpack.c.l.b16 %v870
      %v1061 = vunpack.c.h.b16 %v870
      %v1062 = vunpack.c.l.b16 %v871
      %v1063 = vunpack.c.h.b16 %v871
      %v1064 = vunpack.c.l.b16 %v872
      %v1065 = vunpack.c.h.b16 %v872
      %v1066 = vunpack.c.l.b16 %v873
      %v1067 = vunpack.c.h.b16 %v873
      %v1068 = vunpack.c.l.b16 %v874
      %v1069 = vunpack.c.h.b16 %v874
      %v1070 = vunpack.c.l.b16 %v875
      %v1071 = vunpack.c.h.b16 %v875
      %v1072 = vunpack.c.l.b16 %v876
      %v1073 = vunpack.c.h.b16 %v876
      %v1074 = vunpack.c.l.b16 %v877
      %v1075 = vunpack.c.h.b16 %v877
      %v1076 = vunpack.c.l.b16 %v878
      %v1077 = vunpack.c.h.b16 %v878
      %v1078 = vunpack.c.l.b16 %v879
      %v1079 = vunpack.c.h.b16 %v879
      %v1080 = vpack.c.b16 %v1042, %v1040
      %v1081 = vpack.c.b16 %v1043, %v1041
      %v1082 = vpack.c.b16 %v1046, %v1044
      %v1083 = vpack.c.b16 %v1047, %v1045
      %v1084 = vpack.c.b16 %v1050, %v1048
      %v1085 = vpack.c.b16 %v1051, %v1049
      %v1086 = vpack.c.b16 %v1054, %v1052
      %v1087 = vpack.c.b16 %v1055, %v1053
      %v1088 = vpack.c.b16 %v1058, %v1056
      %v1089 = vpack.c.b16 %v1059, %v1057
      %v1090 = vpack.c.b16 %v1062, %v1060
      %v1091 = vpack.c.b16 %v1063, %v1061
      %v1092 = vpack.c.b16 %v1066, %v1064
      %v1093 = vpack.c.b16 %v1067, %v1065
      %v1094 = vpack.c.b16 %v1070, %v1068
      %v1095 = vpack.c.b16 %v1071, %v1069
      %v1096 = vpack.c.b16 %v1074, %v1072
      %v1097 = vpack.c.b16 %v1075, %v1073
      %v1098 = vpack.c.b16 %v1078, %v1076
      %v1099 = vpack.c.b16 %v1079, %v1077
      %v1111 = vsel %vm609, %v1081, 0
      %v1114 = vsel %vm609, %v1083, 0
      %v1117 = vsel %vm609, %v1085, 0
      %v1120 = vsel %vm609, %v1087, 0
      %v1123 = vsel %vm609, %v1089, 0
      %v1126 = vsel %vm609, %v1091, 0
      %v1129 = vsel %vm609, %v1093, 0
      %v1132 = vsel %vm609, %v1095, 0
      %v1135 = vsel %vm609, %v1097, 0
      %v1138 = vsel %vm609, %v1099, 0
      %v1141 = vsel %vm640, %v898, 0
      %v1144 = vsel %vm640, %v899, 0
      %1146 = vmatprep.subr.bf16.mxu0 %v881
      %1147 = vmatpush1.bf16.msra.mxu0 %v880
      %1148 = vmatprep.subr.bf16.mxu0 %v883
      %1149 = vmatpush1.bf16.msra.mxu0 %v882
      %1150 = vmatprep.subr.bf16.mxu0 %v885
      %1151 = vmatpush1.bf16.msra.mxu0 %v884
      %1152 = vmatprep.subr.bf16.mxu0 %v887
      %1153 = vmatpush1.bf16.msra.mxu0 %v886
      %1154 = vmatprep.subr.bf16.mxu0 %v889
      %1155 = vmatpush1.bf16.msra.mxu0 %v888
      %1156 = vmatprep.subr.bf16.mxu0 %v891
      %1157 = vmatpush1.bf16.msra.mxu0 %v890
      %1158 = vmatprep.subr.bf16.mxu0 %v893
      %1159 = vmatpush1.bf16.msra.mxu0 %v892
      %1160 = vmatprep.subr.bf16.mxu0 %v895
      %1161 = vmatpush1.bf16.msra.mxu0 %v894
      %1162 = vmatprep.subr.bf16.mxu0 %v897
      %1163 = vmatpush1.bf16.msra.mxu0 %v896
      %1164 = vmatprep.subr.bf16.mxu0 %v1144
      %1165 = vmatpush1.bf16.msra.mxu0 %v1141
      %1166 = vmatprep.subr.bf16.mxu0 0
      %1167 = vmatpush1.bf16.msra.mxu0 0
      %1168 = vmatprep.subr.bf16.mxu0 0
      %1169 = vmatpush1.bf16.msra.mxu0 0
      %1170 = vmatprep.subr.bf16.mxu0 0
      %1171 = vmatpush1.bf16.msra.mxu0 0
      %1172 = vmatprep.subr.bf16.mxu0 0
      %1173 = vmatpush1.bf16.msra.mxu0 0
      %1174 = vmatprep.subr.bf16.mxu0 0
      %1175 = vmatpush1.bf16.msra.mxu0 0
      %1176 = vmatprep.subr.bf16.mxu0 0
      %1177 = vmatpush1.bf16.msra.mxu0 0
      %1178 = vmatprep.mubr.bf16.mxu0 %v1111
      %1179 = vmatmul.mubr.bf16.gmra.mrb[0].mxu0 %v1080
      %v1180 = vpop.f32.mrb[0].mxu0
      %v1181 = vadd.f32 %v923, %v1180
      %v1182 = vpop.f32.mrb[0].mxu0
      %v1183 = vadd.f32 %v923, %v1182
      %v1184 = vpop.f32.mrb[0].mxu0
      %v1185 = vadd.f32 %v928, %v1184
      %v1186 = vpop.f32.mrb[0].mxu0
      %v1187 = vadd.f32 %v928, %v1186
      %1188 = vmatprep.mubr.bf16.mxu0 %v1114
      %1189 = vmatmul.mubr.bf16.gmra.mrb[0].mxu0 %v1082
      %v1190 = vpop.f32.mrb[0].mxu0
      %v1191 = vadd.f32 %v933, %v1190
      %v1192 = vpop.f32.mrb[0].mxu0
      %v1193 = vadd.f32 %v933, %v1192
      %v1194 = vpop.f32.mrb[0].mxu0
      %v1195 = vadd.f32 %v938, %v1194
      %v1196 = vpop.f32.mrb[0].mxu0
      %v1197 = vadd.f32 %v938, %v1196
      %1198 = vmatprep.mubr.bf16.mxu0 %v1117
      %1199 = vmatmul.mubr.bf16.gmra.mrb[0].mxu0 %v1084
      %v1200 = vpop.f32.mrb[0].mxu0
      %v1201 = vadd.f32 %v943, %v1200
      %v1202 = vpop.f32.mrb[0].mxu0
      %v1203 = vadd.f32 %v943, %v1202
      %v1204 = vpop.f32.mrb[0].mxu0
      %v1205 = vadd.f32 %v948, %v1204
      %v1206 = vpop.f32.mrb[0].mxu0
      %v1207 = vadd.f32 %v948, %v1206
      %1208 = vmatprep.mubr.bf16.mxu0 %v1120
      %1209 = vmatmul.mubr.bf16.gmra.mrb[0].mxu0 %v1086
      %v1210 = vpop.f32.mrb[0].mxu0
      %v1211 = vadd.f32 %v953, %v1210
      %v1212 = vpop.f32.mrb[0].mxu0
      %v1213 = vadd.f32 %v953, %v1212
      %v1214 = vpop.f32.mrb[0].mxu0
      %v1215 = vadd.f32 %v958, %v1214
      %v1216 = vpop.f32.mrb[0].mxu0
      %v1217 = vadd.f32 %v958, %v1216
      %1218 = vmatprep.mubr.bf16.mxu0 %v1123
      %1219 = vmatmul.mubr.bf16.gmra.mrb[0].mxu0 %v1088
      %v1220 = vpop.f32.mrb[0].mxu0
      %v1221 = vadd.f32 %v963, %v1220
      %v1222 = vpop.f32.mrb[0].mxu0
      %v1223 = vadd.f32 %v963, %v1222
      %v1224 = vpop.f32.mrb[0].mxu0
      %v1225 = vadd.f32 %v968, %v1224
      %v1226 = vpop.f32.mrb[0].mxu0
      %v1227 = vadd.f32 %v968, %v1226
      %1228 = vmatprep.mubr.bf16.mxu0 %v1126
      %1229 = vmatmul.mubr.bf16.gmra.mrb[0].mxu0 %v1090
      %v1230 = vpop.f32.mrb[0].mxu0
      %v1231 = vadd.f32 %v973, %v1230
      %v1232 = vpop.f32.mrb[0].mxu0
      %v1233 = vadd.f32 %v973, %v1232
      %v1234 = vpop.f32.mrb[0].mxu0
      %v1235 = vadd.f32 %v978, %v1234
      %v1236 = vpop.f32.mrb[0].mxu0
      %v1237 = vadd.f32 %v978, %v1236
      %1238 = vmatprep.mubr.bf16.mxu0 %v1129
      %1239 = vmatmul.mubr.bf16.gmra.mrb[0].mxu0 %v1092
      %v1240 = vpop.f32.mrb[0].mxu0
      %v1241 = vadd.f32 %v983, %v1240
      %v1242 = vpop.f32.mrb[0].mxu0
      %v1243 = vadd.f32 %v983, %v1242
      %v1244 = vpop.f32.mrb[0].mxu0
      %v1245 = vadd.f32 %v988, %v1244
      %v1246 = vpop.f32.mrb[0].mxu0
      %v1247 = vadd.f32 %v988, %v1246
      %1248 = vmatprep.mubr.bf16.mxu0 %v1132
      %1249 = vmatmul.mubr.bf16.gmra.mrb[0].mxu0 %v1094
      %v1250 = vpop.f32.mrb[0].mxu0
      %v1251 = vadd.f32 %v993, %v1250
      %v1252 = vpop.f32.mrb[0].mxu0
      %v1253 = vadd.f32 %v993, %v1252
      %v1254 = vpop.f32.mrb[0].mxu0
      %v1255 = vadd.f32 %v998, %v1254
      %v1256 = vpop.f32.mrb[0].mxu0
      %v1257 = vadd.f32 %v998, %v1256
      %1258 = vmatprep.mubr.bf16.mxu0 %v1135
      %1259 = vmatmul.mubr.bf16.gmra.mrb[0].mxu0 %v1096
      %v1260 = vpop.f32.mrb[0].mxu0
      %v1261 = vadd.f32 %v1003, %v1260
      %v1262 = vpop.f32.mrb[0].mxu0
      %v1263 = vadd.f32 %v1003, %v1262
      %v1264 = vpop.f32.mrb[0].mxu0
      %v1265 = vadd.f32 %v1008, %v1264
      %v1266 = vpop.f32.mrb[0].mxu0
      %v1267 = vadd.f32 %v1008, %v1266
      %1268 = vmatprep.mubr.bf16.mxu0 %v1138
      %1269 = vmatmul.mubr.bf16.gmra.mrb[0].mxu0 %v1098
      %v1270 = vpop.f32.mrb[0].mxu0
      %v1271 = vadd.f32 %v1013, %v1270
      %v1272 = vpop.f32.mrb[0].mxu0
      %v1273 = vadd.f32 %v1013, %v1272
      %v1274 = vpop.f32.mrb[0].mxu0
      %v1275 = vadd.f32 %v1018, %v1274
      %v1276 = vpop.f32.mrb[0].mxu0
      %v1277 = vadd.f32 %v1018, %v1276
      %1278 = vdwg.mxu0
      %v1279 = vmax.f32 %v1181, 0.0
      %v1280 = vmax.f32 %v1183, 0.0
      %v1281 = vmax.f32 %v1185, 0.0
      %v1282 = vmax.f32 %v1187, 0.0
      %v1283 = vmax.f32 %v1191, 0.0
      %v1284 = vmax.f32 %v1193, 0.0
      %v1285 = vmax.f32 %v1195, 0.0
      %v1286 = vmax.f32 %v1197, 0.0
      %v1287 = vmax.f32 %v1201, 0.0
      %v1288 = vmax.f32 %v1203, 0.0
      %v1289 = vmax.f32 %v1205, 0.0
      %v1290 = vmax.f32 %v1207, 0.0
      %v1291 = vmax.f32 %v1211, 0.0
      %v1292 = vmax.f32 %v1213, 0.0
      %v1293 = vmax.f32 %v1215, 0.0
      %v1294 = vmax.f32 %v1217, 0.0
      %v1295 = vmax.f32 %v1221, 0.0
      %v1296 = vmax.f32 %v1223, 0.0
      %v1297 = vmax.f32 %v1225, 0.0
      %v1298 = vmax.f32 %v1227, 0.0
      %v1299 = vmax.f32 %v1231, 0.0
      %v1300 = vmax.f32 %v1233, 0.0
      %v1301 = vmax.f32 %v1235, 0.0
      %v1302 = vmax.f32 %v1237, 0.0
      %v1303 = vmax.f32 %v1241, 0.0
      %v1304 = vmax.f32 %v1243, 0.0
      %v1305 = vmax.f32 %v1245, 0.0
      %v1306 = vmax.f32 %v1247, 0.0
      %v1307 = vmax.f32 %v1251, 0.0
      %v1308 = vmax.f32 %v1253, 0.0
      %v1309 = vmax.f32 %v1255, 0.0
      %v1310 = vmax.f32 %v1257, 0.0
      %v1311 = vmax.f32 %v1261, 0.0
      %v1312 = vmax.f32 %v1263, 0.0
      %v1313 = vmax.f32 %v1265, 0.0
      %v1314 = vmax.f32 %v1267, 0.0
      %v1315 = vmax.f32 %v1271, 0.0
      %v1316 = vmax.f32 %v1273, 0.0
      %v1317 = vmax.f32 %v1275, 0.0
      %v1318 = vmax.f32 %v1277, 0.0
      %v1319 = vadd.f32 %v1279, %v820
      %v1320 = vadd.f32 %v1280, %v821
      %v1321 = vadd.f32 %v1281, %v822
      %v1322 = vadd.f32 %v1282, %v823
      %v1323 = vadd.f32 %v1283, %v824
      %v1324 = vadd.f32 %v1284, %v825
      %v1325 = vadd.f32 %v1285, %v826
      %v1326 = vadd.f32 %v1286, %v827
      %v1327 = vadd.f32 %v1287, %v828
      %v1328 = vadd.f32 %v1288, %v829
      %v1329 = vadd.f32 %v1289, %v830
      %v1330 = vadd.f32 %v1290, %v831
      %v1331 = vadd.f32 %v1291, %v832
      %v1332 = vadd.f32 %v1292, %v833
      %v1333 = vadd.f32 %v1293, %v834
      %v1334 = vadd.f32 %v1294, %v835
      %v1335 = vadd.f32 %v1295, %v836
      %v1336 = vadd.f32 %v1296, %v837
      %v1337 = vadd.f32 %v1297, %v838
      %v1338 = vadd.f32 %v1298, %v839
      %v1339 = vadd.f32 %v1299, %v840
      %v1340 = vadd.f32 %v1300, %v841
      %v1341 = vadd.f32 %v1301, %v842
      %v1342 = vadd.f32 %v1302, %v843
      %v1343 = vadd.f32 %v1303, %v844
      %v1344 = vadd.f32 %v1304, %v845
      %v1345 = vadd.f32 %v1305, %v846
      %v1346 = vadd.f32 %v1306, %v847
      %v1347 = vadd.f32 %v1307, %v848
      %v1348 = vadd.f32 %v1308, %v849
      %v1349 = vadd.f32 %v1309, %v850
      %v1350 = vadd.f32 %v1310, %v851
      %v1351 = vadd.f32 %v1311, %v852
      %v1352 = vadd.f32 %v1312, %v853
      %v1353 = vadd.f32 %v1313, %v854
      %v1354 = vadd.f32 %v1314, %v855
      %v1355 = vadd.f32 %v1315, %v856
      %v1356 = vadd.f32 %v1316, %v857
      %v1357 = vadd.f32 %v1317, %v858
      %v1358 = vadd.f32 %v1318, %v859
      %v1359 = vld [vmem:[%s5] sm:$0xff]
      %v1360 = vld [vmem:[%s5 + $0x8] sm:$0xff]
      %v1361 = vld [vmem:[%s5 + $0x10] sm:$0xff]
      %v1362 = vld [vmem:[%s5 + $0x18] sm:$0xff]
      %v1363 = vld [vmem:[%s5 + $0x20] sm:$0xff]
      %v1364 = vld [vmem:[%s5 + $0x28] sm:$0xff]
      %v1365 = vld [vmem:[%s5 + $0x30] sm:$0xff]
      %v1366 = vld [vmem:[%s5 + $0x38] sm:$0xff]
      %v1367 = vld [vmem:[%s5 + $0x40] sm:$0xff]
      %v1368 = vld [vmem:[%s5 + $0x48] sm:$0xff]
      %v1369 = vld [vmem:[%s5 + $0x50] sm:$0xff]
      %v1370 = vld [vmem:[%s5 + $0x58] sm:$0xff]
      %v1371 = vld [vmem:[%s5 + $0x60] sm:$0xff]
      %v1372 = vld [vmem:[%s5 + $0x68] sm:$0xff]
      %v1373 = vld [vmem:[%s5 + $0x70] sm:$0xff]
      %v1374 = vld [vmem:[%s5 + $0x78] sm:$0xff]
      %v1375 = vld [vmem:[%s5 + $0x80] sm:$0xff]
      %v1376 = vld [vmem:[%s5 + $0x88] sm:$0xff]
      %v1377 = vld [vmem:[%s5 + $0x90] sm:$0xff]
      %v1378 = vld [vmem:[%s5 + $0x98] sm:$0x11]
      %v1379 = vpack.c.bf16 %v1321, %v1319
      %v1380 = vpack.c.bf16 %v1322, %v1320
      %v1381 = vpack.c.bf16 %v1325, %v1323
      %v1382 = vpack.c.bf16 %v1326, %v1324
      %v1383 = vpack.c.bf16 %v1329, %v1327
      %v1384 = vpack.c.bf16 %v1330, %v1328
      %v1385 = vpack.c.bf16 %v1333, %v1331
      %v1386 = vpack.c.bf16 %v1334, %v1332
      %v1387 = vpack.c.bf16 %v1337, %v1335
      %v1388 = vpack.c.bf16 %v1338, %v1336
      %v1389 = vpack.c.bf16 %v1341, %v1339
      %v1390 = vpack.c.bf16 %v1342, %v1340
      %v1391 = vpack.c.bf16 %v1345, %v1343
      %v1392 = vpack.c.bf16 %v1346, %v1344
      %v1393 = vpack.c.bf16 %v1349, %v1347
      %v1394 = vpack.c.bf16 %v1350, %v1348
      %v1395 = vpack.c.bf16 %v1353, %v1351
      %v1396 = vpack.c.bf16 %v1354, %v1352
      %v1397 = vpack.c.bf16 %v1357, %v1355
      %v1398 = vpack.c.bf16 %v1358, %v1356
      %v1399 = vld [vmem:[%s6] sm:$0xff]
      %v1400 = vld [vmem:[%s6 + $0x8] sm:$0xff]
      %v1401 = vld [vmem:[%s6 + $0x10] sm:$0xff]
      %v1402 = vld [vmem:[%s6 + $0x18] sm:$0xff]
      %v1403 = vld [vmem:[%s6 + $0x20] sm:$0xff]
      %v1404 = vld [vmem:[%s6 + $0x28] sm:$0xff]
      %v1405 = vld [vmem:[%s6 + $0x30] sm:$0xff]
      %v1406 = vld [vmem:[%s6 + $0x38] sm:$0xff]
      %v1407 = vld [vmem:[%s6 + $0x40] sm:$0xff]
      %v1408 = vld [vmem:[%s6 + $0x48] sm:$0xff]
      %v1409 = vld [vmem:[%s6 + $0x50] sm:$0xff]
      %v1410 = vld [vmem:[%s6 + $0x58] sm:$0xff]
      %v1411 = vld [vmem:[%s6 + $0x60] sm:$0xff]
      %v1412 = vld [vmem:[%s6 + $0x68] sm:$0xff]
      %v1413 = vld [vmem:[%s6 + $0x70] sm:$0xff]
      %v1414 = vld [vmem:[%s6 + $0x78] sm:$0xff]
      %v1415 = vld [vmem:[%s6 + $0x80] sm:$0xff]
      %v1416 = vld [vmem:[%s6 + $0x88] sm:$0xff]
      %v1417 = vld [vmem:[%s6 + $0x90] sm:$0xff]
      %v1418 = vld [vmem:[%s6 + $0x98] sm:$0x3]
      %1420 = vset.pattern.permute.xlu0 0
      %1421 = vperm.xlu0 %1420, %v1399
      %v1422 = vpop.permute.xlu0 %1421
      %1425 = vset.pattern.permute.xlu0 0
      %1426 = vperm.xlu0 %1425, %v1400
      %v1427 = vpop.permute.xlu0 %1426
      %1430 = vset.pattern.permute.xlu0 0
      %1431 = vperm.xlu0 %1430, %v1401
      %v1432 = vpop.permute.xlu0 %1431
      %1435 = vset.pattern.permute.xlu0 0
      %1436 = vperm.xlu0 %1435, %v1402
      %v1437 = vpop.permute.xlu0 %1436
      %1440 = vset.pattern.permute.xlu0 0
      %1441 = vperm.xlu0 %1440, %v1403
      %v1442 = vpop.permute.xlu0 %1441
      %1445 = vset.pattern.permute.xlu0 0
      %1446 = vperm.xlu0 %1445, %v1404
      %v1447 = vpop.permute.xlu0 %1446
      %1450 = vset.pattern.permute.xlu0 0
      %1451 = vperm.xlu0 %1450, %v1405
      %v1452 = vpop.permute.xlu0 %1451
      %1455 = vset.pattern.permute.xlu0 0
      %1456 = vperm.xlu0 %1455, %v1406
      %v1457 = vpop.permute.xlu0 %1456
      %1460 = vset.pattern.permute.xlu0 0
      %1461 = vperm.xlu0 %1460, %v1407
      %v1462 = vpop.permute.xlu0 %1461
      %1465 = vset.pattern.permute.xlu0 0
      %1466 = vperm.xlu0 %1465, %v1408
      %v1467 = vpop.permute.xlu0 %1466
      %1470 = vset.pattern.permute.xlu0 0
      %1471 = vperm.xlu0 %1470, %v1409
      %v1472 = vpop.permute.xlu0 %1471
      %1475 = vset.pattern.permute.xlu0 0
      %1476 = vperm.xlu0 %1475, %v1410
      %v1477 = vpop.permute.xlu0 %1476
      %1480 = vset.pattern.permute.xlu0 0
      %1481 = vperm.xlu0 %1480, %v1411
      %v1482 = vpop.permute.xlu0 %1481
      %1485 = vset.pattern.permute.xlu0 0
      %1486 = vperm.xlu0 %1485, %v1412
      %v1487 = vpop.permute.xlu0 %1486
      %1490 = vset.pattern.permute.xlu0 0
      %1491 = vperm.xlu0 %1490, %v1413
      %v1492 = vpop.permute.xlu0 %1491
      %1495 = vset.pattern.permute.xlu0 0
      %1496 = vperm.xlu0 %1495, %v1414
      %v1497 = vpop.permute.xlu0 %1496
      %1500 = vset.pattern.permute.xlu0 0
      %1501 = vperm.xlu0 %1500, %v1415
      %v1502 = vpop.permute.xlu0 %1501
      %1505 = vset.pattern.permute.xlu0 0
      %1506 = vperm.xlu0 %1505, %v1416
      %v1507 = vpop.permute.xlu0 %1506
      %1510 = vset.pattern.permute.xlu0 0
      %1511 = vperm.xlu0 %1510, %v1417
      %v1512 = vpop.permute.xlu0 %1511
      %1515 = vset.pattern.permute.xlu0 0
      %1516 = vperm.xlu0 %1515, %v1418
      %v1517 = vpop.permute.xlu0 %1516
      %v1539 = vunpack.c.l.b16 %v1359
      %v1540 = vunpack.c.h.b16 %v1359
      %v1541 = vunpack.c.l.b16 %v1360
      %v1542 = vunpack.c.h.b16 %v1360
      %v1543 = vunpack.c.l.b16 %v1361
      %v1544 = vunpack.c.h.b16 %v1361
      %v1545 = vunpack.c.l.b16 %v1362
      %v1546 = vunpack.c.h.b16 %v1362
      %v1547 = vunpack.c.l.b16 %v1363
      %v1548 = vunpack.c.h.b16 %v1363
      %v1549 = vunpack.c.l.b16 %v1364
      %v1550 = vunpack.c.h.b16 %v1364
      %v1551 = vunpack.c.l.b16 %v1365
      %v1552 = vunpack.c.h.b16 %v1365
      %v1553 = vunpack.c.l.b16 %v1366
      %v1554 = vunpack.c.h.b16 %v1366
      %v1555 = vunpack.c.l.b16 %v1367
      %v1556 = vunpack.c.h.b16 %v1367
      %v1557 = vunpack.c.l.b16 %v1368
      %v1558 = vunpack.c.h.b16 %v1368
      %v1559 = vunpack.c.l.b16 %v1369
      %v1560 = vunpack.c.h.b16 %v1369
      %v1561 = vunpack.c.l.b16 %v1370
      %v1562 = vunpack.c.h.b16 %v1370
      %v1563 = vunpack.c.l.b16 %v1371
      %v1564 = vunpack.c.h.b16 %v1371
      %v1565 = vunpack.c.l.b16 %v1372
      %v1566 = vunpack.c.h.b16 %v1372
      %v1567 = vunpack.c.l.b16 %v1373
      %v1568 = vunpack.c.h.b16 %v1373
      %v1569 = vunpack.c.l.b16 %v1374
      %v1570 = vunpack.c.h.b16 %v1374
      %v1571 = vunpack.c.l.b16 %v1375
      %v1572 = vunpack.c.h.b16 %v1375
      %v1573 = vunpack.c.l.b16 %v1376
      %v1574 = vunpack.c.h.b16 %v1376
      %v1575 = vunpack.c.l.b16 %v1377
      %v1576 = vunpack.c.h.b16 %v1377
      %v1577 = vunpack.c.l.b16 %v1378
      %v1578 = vunpack.c.h.b16 %v1378
      %v1579 = vpack.c.b16 %v1541, %v1539
      %v1580 = vpack.c.b16 %v1542, %v1540
      %v1581 = vpack.c.b16 %v1545, %v1543
      %v1582 = vpack.c.b16 %v1546, %v1544
      %v1583 = vpack.c.b16 %v1549, %v1547
      %v1584 = vpack.c.b16 %v1550, %v1548
      %v1585 = vpack.c.b16 %v1553, %v1551
      %v1586 = vpack.c.b16 %v1554, %v1552
      %v1587 = vpack.c.b16 %v1557, %v1555
      %v1588 = vpack.c.b16 %v1558, %v1556
      %v1589 = vpack.c.b16 %v1561, %v1559
      %v1590 = vpack.c.b16 %v1562, %v1560
      %v1591 = vpack.c.b16 %v1565, %v1563
      %v1592 = vpack.c.b16 %v1566, %v1564
      %v1593 = vpack.c.b16 %v1569, %v1567
      %v1594 = vpack.c.b16 %v1570, %v1568
      %v1595 = vpack.c.b16 %v1573, %v1571
      %v1596 = vpack.c.b16 %v1574, %v1572
      %v1597 = vpack.c.b16 %v1577, %v1575
      %v1598 = vpack.c.b16 %v1578, %v1576
      %v1610 = vsel %vm609, %v1580, 0
      %v1613 = vsel %vm609, %v1582, 0
      %v1616 = vsel %vm609, %v1584, 0
      %v1619 = vsel %vm609, %v1586, 0
      %v1622 = vsel %vm609, %v1588, 0
      %v1625 = vsel %vm609, %v1590, 0
      %v1628 = vsel %vm609, %v1592, 0
      %v1631 = vsel %vm609, %v1594, 0
      %v1634 = vsel %vm609, %v1596, 0
      %v1637 = vsel %vm609, %v1598, 0
      %v1640 = vsel %vm640, %v1397, 0
      %v1643 = vsel %vm640, %v1398, 0
      %1645 = vmatprep.subr.bf16.mxu0 %v1380
      %1646 = vmatpush1.bf16.msra.mxu0 %v1379
      %1647 = vmatprep.subr.bf16.mxu0 %v1382
      %1648 = vmatpush1.bf16.msra.mxu0 %v1381
      %1649 = vmatprep.subr.bf16.mxu0 %v1384
      %1650 = vmatpush1.bf16.msra.mxu0 %v1383
      %1651 = vmatprep.subr.bf16.mxu0 %v1386
      %1652 = vmatpush1.bf16.msra.mxu0 %v1385
      %1653 = vmatprep.subr.bf16.mxu0 %v1388
      %1654 = vmatpush1.bf16.msra.mxu0 %v1387
      %1655 = vmatprep.subr.bf16.mxu0 %v1390
      %1656 = vmatpush1.bf16.msra.mxu0 %v1389
      %1657 = vmatprep.subr.bf16.mxu0 %v1392
      %1658 = vmatpush1.bf16.msra.mxu0 %v1391
      %1659 = vmatprep.subr.bf16.mxu0 %v1394
      %1660 = vmatpush1.bf16.msra.mxu0 %v1393
      %1661 = vmatprep.subr.bf16.mxu0 %v1396
      %1662 = vmatpush1.bf16.msra.mxu0 %v1395
      %1663 = vmatprep.subr.bf16.mxu0 %v1643
      %1664 = vmatpush1.bf16.msra.mxu0 %v1640
      %1665 = vmatprep.subr.bf16.mxu0 0
      %1666 = vmatpush1.bf16.msra.mxu0 0
      %1667 = vmatprep.subr.bf16.mxu0 0
      %1668 = vmatpush1.bf16.msra.mxu0 0
      %1669 = vmatprep.subr.bf16.mxu0 0
      %1670 = vmatpush1.bf16.msra.mxu0 0
      %1671 = vmatprep.subr.bf16.mxu0 0
      %1672 = vmatpush1.bf16.msra.mxu0 0
      %1673 = vmatprep.subr.bf16.mxu0 0
      %1674 = vmatpush1.bf16.msra.mxu0 0
      %1675 = vmatprep.subr.bf16.mxu0 0
      %1676 = vmatpush1.bf16.msra.mxu0 0
      %1677 = vmatprep.mubr.bf16.mxu0 %v1610
      %1678 = vmatmul.mubr.bf16.gmra.mrb[0].mxu0 %v1579
      %v1679 = vpop.f32.mrb[0].mxu0
      %v1680 = vadd.f32 %v1422, %v1679
      %v1681 = vpop.f32.mrb[0].mxu0
      %v1682 = vadd.f32 %v1422, %v1681
      %v1683 = vpop.f32.mrb[0].mxu0
      %v1684 = vadd.f32 %v1427, %v1683
      %v1685 = vpop.f32.mrb[0].mxu0
      %v1686 = vadd.f32 %v1427, %v1685
      %1687 = vmatprep.mubr.bf16.mxu0 %v1613
      %1688 = vmatmul.mubr.bf16.gmra.mrb[0].mxu0 %v1581
      %v1689 = vpop.f32.mrb[0].mxu0
      %v1690 = vadd.f32 %v1432, %v1689
      %v1691 = vpop.f32.mrb[0].mxu0
      %v1692 = vadd.f32 %v1432, %v1691
      %v1693 = vpop.f32.mrb[0].mxu0
      %v1694 = vadd.f32 %v1437, %v1693
      %v1695 = vpop.f32.mrb[0].mxu0
      %v1696 = vadd.f32 %v1437, %v1695
      %1697 = vmatprep.mubr.bf16.mxu0 %v1616
      %1698 = vmatmul.mubr.bf16.gmra.mrb[0].mxu0 %v1583
      %v1699 = vpop.f32.mrb[0].mxu0
      %v1700 = vadd.f32 %v1442, %v1699
      %v1701 = vpop.f32.mrb[0].mxu0
      %v1702 = vadd.f32 %v1442, %v1701
      %v1703 = vpop.f32.mrb[0].mxu0
      %v1704 = vadd.f32 %v1447, %v1703
      %v1705 = vpop.f32.mrb[0].mxu0
      %v1706 = vadd.f32 %v1447, %v1705
      %1707 = vmatprep.mubr.bf16.mxu0 %v1619
      %1708 = vmatmul.mubr.bf16.gmra.mrb[0].mxu0 %v1585
      %v1709 = vpop.f32.mrb[0].mxu0
      %v1710 = vadd.f32 %v1452, %v1709
      %v1711 = vpop.f32.mrb[0].mxu0
      %v1712 = vadd.f32 %v1452, %v1711
      %v1713 = vpop.f32.mrb[0].mxu0
      %v1714 = vadd.f32 %v1457, %v1713
      %v1715 = vpop.f32.mrb[0].mxu0
      %v1716 = vadd.f32 %v1457, %v1715
      %1717 = vmatprep.mubr.bf16.mxu0 %v1622
      %1718 = vmatmul.mubr.bf16.gmra.mrb[0].mxu0 %v1587
      %v1719 = vpop.f32.mrb[0].mxu0
      %v1720 = vadd.f32 %v1462, %v1719
      %v1721 = vpop.f32.mrb[0].mxu0
      %v1722 = vadd.f32 %v1462, %v1721
      %v1723 = vpop.f32.mrb[0].mxu0
      %v1724 = vadd.f32 %v1467, %v1723
      %v1725 = vpop.f32.mrb[0].mxu0
      %v1726 = vadd.f32 %v1467, %v1725
      %1727 = vmatprep.mubr.bf16.mxu0 %v1625
      %1728 = vmatmul.mubr.bf16.gmra.mrb[0].mxu0 %v1589
      %v1729 = vpop.f32.mrb[0].mxu0
      %v1730 = vadd.f32 %v1472, %v1729
      %v1731 = vpop.f32.mrb[0].mxu0
      %v1732 = vadd.f32 %v1472, %v1731
      %v1733 = vpop.f32.mrb[0].mxu0
      %v1734 = vadd.f32 %v1477, %v1733
      %v1735 = vpop.f32.mrb[0].mxu0
      %v1736 = vadd.f32 %v1477, %v1735
      %1737 = vmatprep.mubr.bf16.mxu0 %v1628
      %1738 = vmatmul.mubr.bf16.gmra.mrb[0].mxu0 %v1591
      %v1739 = vpop.f32.mrb[0].mxu0
      %v1740 = vadd.f32 %v1482, %v1739
      %v1741 = vpop.f32.mrb[0].mxu0
      %v1742 = vadd.f32 %v1482, %v1741
      %v1743 = vpop.f32.mrb[0].mxu0
      %v1744 = vadd.f32 %v1487, %v1743
      %v1745 = vpop.f32.mrb[0].mxu0
      %v1746 = vadd.f32 %v1487, %v1745
      %1747 = vmatprep.mubr.bf16.mxu0 %v1631
      %1748 = vmatmul.mubr.bf16.gmra.mrb[0].mxu0 %v1593
      %v1749 = vpop.f32.mrb[0].mxu0
      %v1750 = vadd.f32 %v1492, %v1749
      %v1751 = vpop.f32.mrb[0].mxu0
      %v1752 = vadd.f32 %v1492, %v1751
      %v1753 = vpop.f32.mrb[0].mxu0
      %v1754 = vadd.f32 %v1497, %v1753
      %v1755 = vpop.f32.mrb[0].mxu0
      %v1756 = vadd.f32 %v1497, %v1755
      %1757 = vmatprep.mubr.bf16.mxu0 %v1634
      %1758 = vmatmul.mubr.bf16.gmra.mrb[0].mxu0 %v1595
      %v1759 = vpop.f32.mrb[0].mxu0
      %v1760 = vadd.f32 %v1502, %v1759
      %v1761 = vpop.f32.mrb[0].mxu0
      %v1762 = vadd.f32 %v1502, %v1761
      %v1763 = vpop.f32.mrb[0].mxu0
      %v1764 = vadd.f32 %v1507, %v1763
      %v1765 = vpop.f32.mrb[0].mxu0
      %v1766 = vadd.f32 %v1507, %v1765
      %1767 = vmatprep.mubr.bf16.mxu0 %v1637
      %1768 = vmatmul.mubr.bf16.gmra.mrb[0].mxu0 %v1597
      %v1769 = vpop.f32.mrb[0].mxu0
      %v1770 = vadd.f32 %v1512, %v1769
      %v1771 = vpop.f32.mrb[0].mxu0
      %v1772 = vadd.f32 %v1512, %v1771
      %v1773 = vpop.f32.mrb[0].mxu0
      %v1774 = vadd.f32 %v1517, %v1773
      %v1775 = vpop.f32.mrb[0].mxu0
      %v1776 = vadd.f32 %v1517, %v1775
      %1777 = vdwg.mxu0
      %v1778 = vmax.f32 %v1680, 0.0
      %v1779 = vmax.f32 %v1682, 0.0
      %v1780 = vmax.f32 %v1684, 0.0
      %v1781 = vmax.f32 %v1686, 0.0
      %v1782 = vmax.f32 %v1690, 0.0
      %v1783 = vmax.f32 %v1692, 0.0
      %v1784 = vmax.f32 %v1694, 0.0
      %v1785 = vmax.f32 %v1696, 0.0
      %v1786 = vmax.f32 %v1700, 0.0
      %v1787 = vmax.f32 %v1702, 0.0
      %v1788 = vmax.f32 %v1704, 0.0
      %v1789 = vmax.f32 %v1706, 0.0
      %v1790 = vmax.f32 %v1710, 0.0
      %v1791 = vmax.f32 %v1712, 0.0
      %v1792 = vmax.f32 %v1714, 0.0
      %v1793 = vmax.f32 %v1716, 0.0
      %v1794 = vmax.f32 %v1720, 0.0
      %v1795 = vmax.f32 %v1722, 0.0
      %v1796 = vmax.f32 %v1724, 0.0
      %v1797 = vmax.f32 %v1726, 0.0
      %v1798 = vmax.f32 %v1730, 0.0
      %v1799 = vmax.f32 %v1732, 0.0
      %v1800 = vmax.f32 %v1734, 0.0
      %v1801 = vmax.f32 %v1736, 0.0
      %v1802 = vmax.f32 %v1740, 0.0
      %v1803 = vmax.f32 %v1742, 0.0
      %v1804 = vmax.f32 %v1744, 0.0
      %v1805 = vmax.f32 %v1746, 0.0
      %v1806 = vmax.f32 %v1750, 0.0
      %v1807 = vmax.f32 %v1752, 0.0
      %v1808 = vmax.f32 %v1754, 0.0
      %v1809 = vmax.f32 %v1756, 0.0
      %v1810 = vmax.f32 %v1760, 0.0
      %v1811 = vmax.f32 %v1762, 0.0
      %v1812 = vmax.f32 %v1764, 0.0
      %v1813 = vmax.f32 %v1766, 0.0
      %v1814 = vmax.f32 %v1770, 0.0
      %v1815 = vmax.f32 %v1772, 0.0
      %v1816 = vmax.f32 %v1774, 0.0
      %v1817 = vmax.f32 %v1776, 0.0
      %v1818 = vadd.f32 %v1778, %v1319
      %v1819 = vadd.f32 %v1779, %v1320
      %v1820 = vadd.f32 %v1780, %v1321
      %v1821 = vadd.f32 %v1781, %v1322
      %v1822 = vadd.f32 %v1782, %v1323
      %v1823 = vadd.f32 %v1783, %v1324
      %v1824 = vadd.f32 %v1784, %v1325
      %v1825 = vadd.f32 %v1785, %v1326
      %v1826 = vadd.f32 %v1786, %v1327
      %v1827 = vadd.f32 %v1787, %v1328
      %v1828 = vadd.f32 %v1788, %v1329
      %v1829 = vadd.f32 %v1789, %v1330
      %v1830 = vadd.f32 %v1790, %v1331
      %v1831 = vadd.f32 %v1791, %v1332
      %v1832 = vadd.f32 %v1792, %v1333
      %v1833 = vadd.f32 %v1793, %v1334
      %v1834 = vadd.f32 %v1794, %v1335
      %v1835 = vadd.f32 %v1795, %v1336
      %v1836 = vadd.f32 %v1796, %v1337
      %v1837 = vadd.f32 %v1797, %v1338
      %v1838 = vadd.f32 %v1798, %v1339
      %v1839 = vadd.f32 %v1799, %v1340
      %v1840 = vadd.f32 %v1800, %v1341
      %v1841 = vadd.f32 %v1801, %v1342
      %v1842 = vadd.f32 %v1802, %v1343
      %v1843 = vadd.f32 %v1803, %v1344
      %v1844 = vadd.f32 %v1804, %v1345
      %v1845 = vadd.f32 %v1805, %v1346
      %v1846 = vadd.f32 %v1806, %v1347
      %v1847 = vadd.f32 %v1807, %v1348
      %v1848 = vadd.f32 %v1808, %v1349
      %v1849 = vadd.f32 %v1809, %v1350
      %v1850 = vadd.f32 %v1810, %v1351
      %v1851 = vadd.f32 %v1811, %v1352
      %v1852 = vadd.f32 %v1812, %v1353
      %v1853 = vadd.f32 %v1813, %v1354
      %v1854 = vadd.f32 %v1814, %v1355
      %v1855 = vadd.f32 %v1815, %v1356
      %v1856 = vadd.f32 %v1816, %v1357
      %v1857 = vadd.f32 %v1817, %v1358
      %1858 = vst [vmem:[%s316] sm:$0xff] %v1818
      %1859 = vst [vmem:[%s316 + $0x8] sm:$0xff] %v1819
      %1860 = vst [vmem:[%s316 + $0x10] sm:$0xff] %v1820
      %1861 = vst [vmem:[%s316 + $0x18] sm:$0xff] %v1821
      %1862 = vst [vmem:[%s316 + $0x20] sm:$0xff] %v1822
      %1863 = vst [vmem:[%s316 + $0x28] sm:$0xff] %v1823
      %1864 = vst [vmem:[%s316 + $0x30] sm:$0xff] %v1824
      %1865 = vst [vmem:[%s316 + $0x38] sm:$0xff] %v1825
      %1866 = vst [vmem:[%s316 + $0x40] sm:$0xff] %v1826
      %1867 = vst [vmem:[%s316 + $0x48] sm:$0xff] %v1827
      %1868 = vst [vmem:[%s316 + $0x50] sm:$0xff] %v1828
      %1869 = vst [vmem:[%s316 + $0x58] sm:$0xff] %v1829
      %1870 = vst [vmem:[%s316 + $0x60] sm:$0xff] %v1830
      %1871 = vst [vmem:[%s316 + $0x68] sm:$0xff] %v1831
      %1872 = vst [vmem:[%s316 + $0x70] sm:$0xff] %v1832
      %1873 = vst [vmem:[%s316 + $0x78] sm:$0xff] %v1833
      %1874 = vst [vmem:[%s316 + $0x80] sm:$0xff] %v1834
      %1875 = vst [vmem:[%s316 + $0x88] sm:$0xff] %v1835
      %1876 = vst [vmem:[%s316 + $0x90] sm:$0xff] %v1836
      %1877 = vst [vmem:[%s316 + $0x98] sm:$0xff] %v1837
      %1878 = vst [vmem:[%s316 + $0xa0] sm:$0xff] %v1838
      %1879 = vst [vmem:[%s316 + $0xa8] sm:$0xff] %v1839
      %1880 = vst [vmem:[%s316 + $0xb0] sm:$0xff] %v1840
      %1881 = vst [vmem:[%s316 + $0xb8] sm:$0xff] %v1841
      %1882 = vst [vmem:[%s316 + $0xc0] sm:$0xff] %v1842
      %1883 = vst [vmem:[%s316 + $0xc8] sm:$0xff] %v1843
      %1884 = vst [vmem:[%s316 + $0xd0] sm:$0xff] %v1844
      %1885 = vst [vmem:[%s316 + $0xd8] sm:$0xff] %v1845
      %1886 = vst [vmem:[%s316 + $0xe0] sm:$0xff] %v1846
      %1887 = vst [vmem:[%s316 + $0xe8] sm:$0xff] %v1847
      %1888 = vst [vmem:[%s316 + $0xf0] sm:$0xff] %v1848
      %1889 = vst [vmem:[%s316 + $0xf8] sm:$0xff] %v1849
      %1890 = vst [vmem:[%s316 + $0x100] sm:$0xff] %v1850
      %1891 = vst [vmem:[%s316 + $0x108] sm:$0xff] %v1851
      %1892 = vst [vmem:[%s316 + $0x110] sm:$0xff] %v1852
      %1893 = vst [vmem:[%s316 + $0x118] sm:$0xff] %v1853
      %1894 = vst [vmem:[%s316 + $0x120] sm:$0xff] %v1854
      %1895 = vst [vmem:[%s316 + $0x128] sm:$0xff] %v1855
      %1896 = vst [vmem:[%s316 + $0x130] sm:$0x3] %v1856
      %1897 = vst [vmem:[%s316 + $0x138] sm:$0x3] %v1857
      %s1898 = smul.u32 2, %s23
      %p1899 = scmp.lt.s32.totalorder %s22, 1
      %s1900 = scalar_select %p1899, %s22, 1
      %p1901 = scmp.lt.s32.totalorder %s1898, 1
      %s1902 = scalar_select %p1901, %s1898, 1
      %s1903 = smul.addr %s1900, 40
      %s1904 = sadd.s32 %s1902, %s1903
      %s1905 = smul.addr %s1904, 8
      %s1906 = scalar_lea.vmem %s7, %s1905
      // Predicated region
      $region49: #{tpu_custom_call.1} parent=47 // pred_check
        %p1907 = pneg %p204
      $region50: #{tpu_custom_call.1} parent=47 // pred_check_branch
        %1909 = sbr.rel (%p1907) target = $region52
      $region51: #{tpu_custom_call.1} parent=47 // pred_region
        %s1910 = smul.u32 2, %s23
      $region52: #{tpu_custom_call.1} parent=47 // pred_fallthru
        _
    $region48: #{tpu_custom_call.1} parent=5 // pred_fallthru
      _
    %p1911 = scmp.le.s32.totalorder 2, %s13
    // Predicated region
    $region53: #{tpu_custom_call.1} parent=5 // pred_check
      %p1912 = pneg %p1911
    $region54: #{tpu_custom_call.1} parent=5 // pred_check_branch
      %1914 = sbr.rel (%p1912) target = $region56
    $region55: #{tpu_custom_call.1} parent=5 // pred_region
      %s1915 = ssub.s32 %s13, 2
      // Predicated region
      $region57: #{tpu_custom_call.1} parent=55 // pred_check
        %p1916 = pneg %p210
      $region58: #{tpu_custom_call.1} parent=55 // pred_check_branch
        %1918 = sbr.rel (%p1916) target = $region60
      $region59: #{tpu_custom_call.1} parent=55 // pred_region
        %s1919 = smul.u32 2, %s25
        %p1920 = scmp.lt.s32.totalorder %s24, 1
        %s1921 = scalar_select %p1920, %s24, 1
        %p1922 = scmp.lt.s32.totalorder %s1919, 1
        %s1923 = scalar_select %p1922, %s1919, 1
        %s1924 = smul.addr %s1921, 40
        %s1925 = sadd.s32 %s1923, %s1924
        %s1926 = smul.addr %s1925, 8
        %s1927 = scalar_lea.vmem %s7, %s1926
      $region60: #{tpu_custom_call.1} parent=55 // pred_fallthru
        _
    $region56: #{tpu_custom_call.1} parent=5 // pred_fallthru
      _
  $region6: #{tpu_custom_call.1} parent=0 // loop_footer
    %s17 = sadd.s32 1, %s13
  $region7: #{tpu_custom_call.1} parent=0 // loop_footer_branch
    %12 = sbr.rel target = $region3
  $region8: #{tpu_custom_call.1} parent=0 // loop_exit
    _

</llo_original>
